<compile_context>
chip_gen: v7x
topology: tpu7x:2x2x1
jax: 0.10.0
libtpu: 0.0.40
codegen_flags: <defaults>
</compile_context>

<pallas_src>
import numpy as np
import jax
import jax.numpy as jnp
from jax.experimental import pallas as pl
from jax.experimental.pallas import tpu as pltpu


# ---------------------------------------------------------------------------
# Fused per-stage Pallas kernel
# ---------------------------------------------------------------------------

def _fused_stage_kernel(x_ref, enc_ref, wt_ref, bt_ref, w1_ref, b1_ref,
                        w2_ref, b2_ref, o_ref):
    """One full decoder stage for a single batch element (channels-last).

    x_ref  : (1, L, Cin)        stage input
    enc_ref: (1, L, 2*Ce)       skip connection, even/odd packed along lanes
    wt_ref : (Cin, 2*Cm)        ConvTranspose1d weights, taps packed [w0 | w1]
    bt_ref : (1, 2*Cm)          ConvTranspose1d bias, duplicated [b | b]
    w1_ref : (3*(Cm+Ce), Cm)    conv1 weights, taps stacked along rows
    b1_ref : (1, Cm)
    w2_ref : (3*Cm, Cm)         conv2 weights, taps stacked along rows
    b2_ref : (1, Cm)
    o_ref  : (1, L, 2*Cm)       stage output, even/odd packed along lanes
    """
    x = x_ref[0]                       # (L, Cin)
    enc = enc_ref[0]                   # (L, 2*Ce)
    L = x.shape[0]
    cm = b1_ref.shape[-1]
    ce = enc.shape[-1] // 2

    def shift_down(a):                 # row l gets a[l-1]; zero row at l = 0
        idx = jax.lax.broadcasted_iota(jnp.int32, a.shape, 0)
        return jnp.where(idx == 0, 0.0, pltpu.roll(a, shift=1, axis=0))

    def shift_up(a):                   # row l gets a[l+1]; zero row at l = L-1
        idx = jax.lax.broadcasted_iota(jnp.int32, a.shape, 0)
        return jnp.where(idx == a.shape[0] - 1, 0.0,
                         pltpu.roll(a, shift=a.shape[0] - 1, axis=0))

    # --- ConvTranspose1d(k=2, s=2): one MXU matmul, result already packed:
    #     y[:, :cm] = output at even positions 2l, y[:, cm:] = positions 2l+1.
    y = jnp.dot(x, wt_ref[...], preferred_element_type=jnp.float32) + bt_ref[...]

    # --- skip concat (VMEM only): z[2l] / z[2l+1] in even/odd split form.
    z_e = jnp.concatenate([y[:, :cm], enc[:, :ce]], axis=-1)       # (L, Cm+Ce)
    z_o = jnp.concatenate([y[:, cm:], enc[:, ce:]], axis=-1)       # (L, Cm+Ce)

    # --- conv1 (k=3, 'same') + ReLU over the length-2L sequence:
    # even outputs 2l   see taps (z[2l-1], z[2l],   z[2l+1]) = (z_o[l-1], z_e[l], z_o[l])
    # odd  outputs 2l+1 see taps (z[2l],   z[2l+1], z[2l+2]) = (z_e[l],   z_o[l], z_e[l+1])
    rows_e = jnp.concatenate([shift_down(z_o), z_e, z_o], axis=-1)  # (L, 3*(Cm+Ce))
    rows_o = jnp.concatenate([z_e, z_o, shift_up(z_e)], axis=-1)    # (L, 3*(Cm+Ce))
    h = jnp.dot(jnp.concatenate([rows_e, rows_o], axis=0), w1_ref[...],
                preferred_element_type=jnp.float32) + b1_ref[...]
    h = jnp.maximum(h, 0.0)            # (2L, Cm): rows [0:L] even, [L:2L] odd
    h_e = h[:L]
    h_o = h[L:]

    # --- conv2 (k=3, 'same') + ReLU, same tap-collapsed structure.
    rows2_e = jnp.concatenate([shift_down(h_o), h_e, h_o], axis=-1)  # (L, 3*Cm)
    rows2_o = jnp.concatenate([h_e, h_o, shift_up(h_e)], axis=-1)    # (L, 3*Cm)
    o = jnp.dot(jnp.concatenate([rows2_e, rows2_o], axis=0), w2_ref[...],
                preferred_element_type=jnp.float32) + b2_ref[...]
    o = jnp.maximum(o, 0.0)            # (2L, Cm)

    # pack back to even/odd lane layout (L, 2*Cm); the wrapper reshape to
    # (2L, Cm) is contiguous and therefore free.
    o_ref[0] = jnp.concatenate([o[:L], o[L:]], axis=-1).astype(o_ref.dtype)


# ---------------------------------------------------------------------------
# Wrappers
# ---------------------------------------------------------------------------

def _fused_stage(x, enc_packed, p):
    """x: (B, L, Cin); enc_packed: (B, L, 2*Ce); p: packed stage params."""
    B, L, Cin = x.shape
    cm = p["b1"].shape[-1]
    two_ce = enc_packed.shape[-1]
    return pl.pallas_call(
        _fused_stage_kernel,
        out_shape=jax.ShapeDtypeStruct((B, L, 2 * cm), x.dtype),
        grid=(B,),
        in_specs=[
            pl.BlockSpec((1, L, Cin), lambda b: (b, 0, 0)),
            pl.BlockSpec((1, L, two_ce), lambda b: (b, 0, 0)),
            pl.BlockSpec(p["wt"].shape, lambda b: (0, 0)),
            pl.BlockSpec(p["bt"].shape, lambda b: (0, 0)),
            pl.BlockSpec(p["w1"].shape, lambda b: (0, 0)),
            pl.BlockSpec(p["b1"].shape, lambda b: (0, 0)),
            pl.BlockSpec(p["w2"].shape, lambda b: (0, 0)),
            pl.BlockSpec(p["b2"].shape, lambda b: (0, 0)),
        ],
        out_specs=pl.BlockSpec((1, L, 2 * cm), lambda b: (b, 0, 0)),
        compiler_params=pltpu.CompilerParams(
            dimension_semantics=("parallel",)),
    )(x, enc_packed, p["wt"], p["bt"], p["w1"], p["b1"], p["w2"], p["b2"])


def decoder_forward(packed_params, x, encoder_outputs):
    """x: (B, L, channels[0]) channels-last.
    encoder_outputs[i]: (B, 2^(i+1)*L, channels[i+1]) channels-last."""
    B = x.shape[0]
    for p, enc in zip(packed_params, encoder_outputs):
        L = x.shape[1]
        ce = enc.shape[-1]
        cm = p["b1"].shape[-1]
        # even/odd lane packing of the skip connection: contiguous (free) reshape
        enc_packed = enc.reshape(B, L, 2 * ce)
        out_packed = _fused_stage(x, enc_packed, p)
        # unpack even/odd lanes -> length-2L sequence: contiguous (free) reshape
        x = out_packed.reshape(B, 2 * L, cm)
    return x


# ---------------------------------------------------------------------------
# Parameter init (torch layouts) and one-time weight packing
# ---------------------------------------------------------------------------

def init_decoder_params(key, channels):
    stages = []
    for i in range(len(channels) - 1):
        cin, cout = channels[i], channels[i + 1]
        key, k0, k1, k2, k3, k4, k5 = jax.random.split(key, 7)
        stages.append(dict(
            # ConvTranspose1d weight: (in_channels, out_channels, kernel=2)
            tconv_w=0.1 * jax.random.normal(k0, (cin, cout, 2), jnp.float32),
            tconv_b=0.1 * jax.random.normal(k1, (cout,), jnp.float32),
            # Block.conv1: Conv1d(cin, cout, 3) weight (Cout, Cin, 3)
            conv1_w=0.1 * jax.random.normal(k2, (cout, cin, 3), jnp.float32),
            conv1_b=0.1 * jax.random.normal(k3, (cout,), jnp.float32),
            # Block.conv2: Conv1d(cout, cout, 3)
            conv2_w=0.1 * jax.random.normal(k4, (cout, cout, 3), jnp.float32),
            conv2_b=0.1 * jax.random.normal(k5, (cout,), jnp.float32),
        ))
    return stages


def pack_decoder_params(stage_params):
    """Pre-pack/transpose all weights once (hoisted out of the forward pass)."""
    packed = []
    for p in stage_params:
        wt = jnp.concatenate([p["tconv_w"][:, :, 0],
                              p["tconv_w"][:, :, 1]], axis=1)          # (Cin, 2*Cm)
        bt = jnp.concatenate([p["tconv_b"], p["tconv_b"]])[None, :]    # (1, 2*Cm)
        w1 = jnp.concatenate([p["conv1_w"][:, :, t].T for t in range(3)],
                             axis=0)                                   # (3*Cin, Cm)
        w2 = jnp.concatenate([p["conv2_w"][:, :, t].T for t in range(3)],
                             axis=0)                                   # (3*Cm, Cm)
        packed.append(dict(wt=wt, bt=bt,
                           w1=w1, b1=p["conv1_b"][None, :],
                           w2=w2, b2=p["conv2_b"][None, :]))
    return packed


# ---------------------------------------------------------------------------
# Pure-JAX reference (for correctness check)
# ---------------------------------------------------------------------------

def _ref_convt(x, w, b):
    B, L, Cin = x.shape
    Cout = w.shape[1]
    y0 = jnp.einsum("bli,io->blo", x, w[:, :, 0]) + b
    y1 = jnp.einsum("bli,io->blo", x, w[:, :, 1]) + b
    return jnp.stack([y0, y1], axis=2).reshape(B, 2 * L, Cout)


def _ref_conv3_relu(x, w, b):
    B, L, Cin = x.shape
    xp = jnp.pad(x, ((0, 0), (1, 1), (0, 0)))
    out = (jnp.einsum("bli,io->blo", xp[:, 0:L, :], w[:, :, 0].T)
           + jnp.einsum("bli,io->blo", xp[:, 1:L + 1, :], w[:, :, 1].T)
           + jnp.einsum("bli,io->blo", xp[:, 2:L + 2, :], w[:, :, 2].T)
           + b)
    return jnp.maximum(out, 0.0)


def _ref_decoder(stage_params, x, encoder_outputs):
    for i, p in enumerate(stage_params):
        x = _ref_convt(x, p["tconv_w"], p["tconv_b"])
        x = jnp.concatenate([x, encoder_outputs[i]], axis=-1)
        x = _ref_conv3_relu(x, p["conv1_w"], p["conv1_b"])
        x = _ref_conv3_relu(x, p["conv2_w"], p["conv2_b"])
    return x


# ---------------------------------------------------------------------------

if __name__ == "__main__":
    channels = [16, 8, 4]      # U-Net skip-cat requires channels[i] == 2*channels[i+1]
    B, L0 = 2, 8

    key = jax.random.PRNGKey(0)
    key, kx, ke0, ke1 = jax.random.split(key, 4)

    # channels-last inputs (B, L, C); torch NCW equivalents: (2,16,8), [(2,8,16),(2,4,32)]
    x = jax.random.normal(kx, (B, L0, channels[0]), jnp.float32)
    encoder_outputs = [
        jax.random.normal(ke0, (B, 2 * L0, channels[1]), jnp.float32),
        jax.random.normal(ke1, (B, 4 * L0, channels[2]), jnp.float32),
    ]

    raw_params = init_decoder_params(key, channels)
    packed_params = pack_decoder_params(raw_params)

    fwd = jax.jit(decoder_forward)
    out = jax.block_until_ready(fwd(packed_params, x, encoder_outputs))

    ref = jax.block_until_ready(_ref_decoder(raw_params, x, encoder_outputs))
    np.testing.assert_allclose(np.asarray(out), np.asarray(ref),
                               rtol=1e-5, atol=1e-5)

    assert out.shape == (B, 4 * L0, channels[-1])
    print("KERNEL_OK")
</pallas_src>

<mosaic_0001>
module attributes {stable_mosaic.version = 11 : i64} {
  func.func @_fused_stage_kernel(%arg0: i32, %arg1: memref<1x16x8xf32, #tpu.memory_space<vmem>>, %arg2: memref<1x16x8xf32, #tpu.memory_space<vmem>>, %arg3: memref<8x8xf32, #tpu.memory_space<vmem>>, %arg4: memref<1x8xf32, #tpu.memory_space<vmem>>, %arg5: memref<24x4xf32, #tpu.memory_space<vmem>>, %arg6: memref<1x4xf32, #tpu.memory_space<vmem>>, %arg7: memref<12x4xf32, #tpu.memory_space<vmem>>, %arg8: memref<1x4xf32, #tpu.memory_space<vmem>>, %arg9: memref<1x16x8xf32, #tpu.memory_space<vmem>>) attributes {dimension_semantics = [#tpu.dimension_semantics<parallel>], iteration_bounds = array<i64: 2>, scalar_prefetch = 0 : i64, scratch_operands = 0 : i64, tpu.core_type = #tpu.core_type<tc>, window_params = [{transform_indices = @transform_0, window_bounds = array<i64: 1, 16, 8>}, {transform_indices = @transform_1, window_bounds = array<i64: 1, 16, 8>}, {pipeline_mode = #tpu.pipeline_mode<synchronous>, transform_indices = @transform_2, window_bounds = array<i64: 8, 8>}, {pipeline_mode = #tpu.pipeline_mode<synchronous>, transform_indices = @transform_3, window_bounds = array<i64: 1, 8>}, {pipeline_mode = #tpu.pipeline_mode<synchronous>, transform_indices = @transform_4, window_bounds = array<i64: 24, 4>}, {pipeline_mode = #tpu.pipeline_mode<synchronous>, transform_indices = @transform_5, window_bounds = array<i64: 1, 4>}, {pipeline_mode = #tpu.pipeline_mode<synchronous>, transform_indices = @transform_6, window_bounds = array<i64: 12, 4>}, {pipeline_mode = #tpu.pipeline_mode<synchronous>, transform_indices = @transform_7, window_bounds = array<i64: 1, 4>}, {transform_indices = @transform_8, window_bounds = array<i64: 1, 16, 8>}]} {
    %c0 = arith.constant 0 : index
    %c0_0 = arith.constant 0 : index
    %c0_1 = arith.constant 0 : index
    %0 = vector.load %arg1[%c0, %c0_0, %c0_1] : memref<1x16x8xf32, #tpu.memory_space<vmem>>, vector<1x16x8xf32>
    %1 = vector.shape_cast %0 : vector<1x16x8xf32> to vector<16x8xf32>
    %c0_2 = arith.constant 0 : index
    %c0_3 = arith.constant 0 : index
    %c0_4 = arith.constant 0 : index
    %2 = vector.load %arg2[%c0_2, %c0_3, %c0_4] : memref<1x16x8xf32, #tpu.memory_space<vmem>>, vector<1x16x8xf32>
    %3 = vector.shape_cast %2 : vector<1x16x8xf32> to vector<16x8xf32>
    %c0_5 = arith.constant 0 : index
    %c0_6 = arith.constant 0 : index
    %4 = vector.load %arg3[%c0_5, %c0_6] : memref<8x8xf32, #tpu.memory_space<vmem>>, vector<8x8xf32>
    %cst = arith.constant dense<0.000000e+00> : vector<16x8xf32>
    %5 = tpu.matmul %1, %4, %cst {dimension_numbers = #tpu.dot_dimension_numbers<[1], [0], [0], [1], [0, 0, 1, 1], [], []>} : vector<16x8xf32>, vector<8x8xf32>, vector<16x8xf32> -> vector<16x8xf32>
    %c0_7 = arith.constant 0 : index
    %c0_8 = arith.constant 0 : index
    %6 = vector.load %arg4[%c0_7, %c0_8] : memref<1x8xf32, #tpu.memory_space<vmem>>, vector<1x8xf32>
    %7 = vector.broadcast %6 : vector<1x8xf32> to vector<16x8xf32>
    %8 = arith.addf %5, %7 : vector<16x8xf32>
    %9 = vector.extract_strided_slice %8 {offsets = [0, 0], sizes = [16, 4], strides = [1, 1]} : vector<16x8xf32> to vector<16x4xf32>
    %10 = vector.extract_strided_slice %3 {offsets = [0, 0], sizes = [16, 4], strides = [1, 1]} : vector<16x8xf32> to vector<16x4xf32>
    %11 = tpu.concatenate %9, %10 in 1 : vector<16x4xf32>, vector<16x4xf32> -> vector<16x8xf32>
    %12 = vector.extract_strided_slice %8 {offsets = [0, 4], sizes = [16, 4], strides = [1, 1]} : vector<16x8xf32> to vector<16x4xf32>
    %13 = vector.extract_strided_slice %3 {offsets = [0, 4], sizes = [16, 4], strides = [1, 1]} : vector<16x8xf32> to vector<16x4xf32>
    %14 = tpu.concatenate %12, %13 in 1 : vector<16x4xf32>, vector<16x4xf32> -> vector<16x8xf32>
    %15 = tpu.iota {dimensions = array<i32: 0>} : vector<16x8xi32>
    %c0_i32 = arith.constant 0 : i32
    %16 = vector.broadcast %c0_i32 : i32 to vector<16x8xi32>
    %17 = arith.cmpi eq, %15, %16 : vector<16x8xi32>
    %c1_i32 = arith.constant 1 : i32
    %18 = tpu.dynamic_rotate %14 by %c1_i32 dim 0 : vector<16x8xf32>, i32 -> vector<16x8xf32>
    %cst_9 = arith.constant 0.000000e+00 : f32
    %19 = vector.broadcast %cst_9 : f32 to vector<16x8xf32>
    %20 = arith.select %17, %19, %18 : vector<16x8xi1>, vector<16x8xf32>
    %21 = tpu.concatenate %20, %11, %14 in 1 : vector<16x8xf32>, vector<16x8xf32>, vector<16x8xf32> -> vector<16x24xf32>
    %22 = tpu.iota {dimensions = array<i32: 0>} : vector<16x8xi32>
    %c15_i32 = arith.constant 15 : i32
    %23 = vector.broadcast %c15_i32 : i32 to vector<16x8xi32>
    %24 = arith.cmpi eq, %22, %23 : vector<16x8xi32>
    %c15_i32_10 = arith.constant 15 : i32
    %25 = tpu.dynamic_rotate %11 by %c15_i32_10 dim 0 : vector<16x8xf32>, i32 -> vector<16x8xf32>
    %cst_11 = arith.constant 0.000000e+00 : f32
    %26 = vector.broadcast %cst_11 : f32 to vector<16x8xf32>
    %27 = arith.select %24, %26, %25 : vector<16x8xi1>, vector<16x8xf32>
    %28 = tpu.concatenate %11, %14, %27 in 1 : vector<16x8xf32>, vector<16x8xf32>, vector<16x8xf32> -> vector<16x24xf32>
    %29 = tpu.concatenate %21, %28 in 0 : vector<16x24xf32>, vector<16x24xf32> -> vector<32x24xf32>
    %c0_12 = arith.constant 0 : index
    %c0_13 = arith.constant 0 : index
    %30 = vector.load %arg5[%c0_12, %c0_13] : memref<24x4xf32, #tpu.memory_space<vmem>>, vector<24x4xf32>
    %cst_14 = arith.constant dense<0.000000e+00> : vector<32x4xf32>
    %31 = tpu.matmul %29, %30, %cst_14 {dimension_numbers = #tpu.dot_dimension_numbers<[1], [0], [0], [1], [0, 0, 1, 1], [], []>} : vector<32x24xf32>, vector<24x4xf32>, vector<32x4xf32> -> vector<32x4xf32>
    %c0_15 = arith.constant 0 : index
    %c0_16 = arith.constant 0 : index
    %32 = vector.load %arg6[%c0_15, %c0_16] : memref<1x4xf32, #tpu.memory_space<vmem>>, vector<1x4xf32>
    %33 = vector.broadcast %32 : vector<1x4xf32> to vector<32x4xf32>
    %34 = arith.addf %31, %33 : vector<32x4xf32>
    %cst_17 = arith.constant 0.000000e+00 : f32
    %35 = vector.broadcast %cst_17 : f32 to vector<32x4xf32>
    %36 = arith.maximumf %34, %35 : vector<32x4xf32>
    %37 = vector.extract_strided_slice %36 {offsets = [0, 0], sizes = [16, 4], strides = [1, 1]} : vector<32x4xf32> to vector<16x4xf32>
    %38 = vector.extract_strided_slice %36 {offsets = [16, 0], sizes = [16, 4], strides = [1, 1]} : vector<32x4xf32> to vector<16x4xf32>
    %39 = tpu.iota {dimensions = array<i32: 0>} : vector<16x4xi32>
    %c0_i32_18 = arith.constant 0 : i32
    %40 = vector.broadcast %c0_i32_18 : i32 to vector<16x4xi32>
    %41 = arith.cmpi eq, %39, %40 : vector<16x4xi32>
    %c1_i32_19 = arith.constant 1 : i32
    %42 = tpu.dynamic_rotate %38 by %c1_i32_19 dim 0 : vector<16x4xf32>, i32 -> vector<16x4xf32>
    %cst_20 = arith.constant 0.000000e+00 : f32
    %43 = vector.broadcast %cst_20 : f32 to vector<16x4xf32>
    %44 = arith.select %41, %43, %42 : vector<16x4xi1>, vector<16x4xf32>
    %45 = tpu.concatenate %44, %37, %38 in 1 : vector<16x4xf32>, vector<16x4xf32>, vector<16x4xf32> -> vector<16x12xf32>
    %46 = tpu.iota {dimensions = array<i32: 0>} : vector<16x4xi32>
    %c15_i32_21 = arith.constant 15 : i32
    %47 = vector.broadcast %c15_i32_21 : i32 to vector<16x4xi32>
    %48 = arith.cmpi eq, %46, %47 : vector<16x4xi32>
    %c15_i32_22 = arith.constant 15 : i32
    %49 = tpu.dynamic_rotate %37 by %c15_i32_22 dim 0 : vector<16x4xf32>, i32 -> vector<16x4xf32>
    %cst_23 = arith.constant 0.000000e+00 : f32
    %50 = vector.broadcast %cst_23 : f32 to vector<16x4xf32>
    %51 = arith.select %48, %50, %49 : vector<16x4xi1>, vector<16x4xf32>
    %52 = tpu.concatenate %37, %38, %51 in 1 : vector<16x4xf32>, vector<16x4xf32>, vector<16x4xf32> -> vector<16x12xf32>
    %53 = tpu.concatenate %45, %52 in 0 : vector<16x12xf32>, vector<16x12xf32> -> vector<32x12xf32>
    %c0_24 = arith.constant 0 : index
    %c0_25 = arith.constant 0 : index
    %54 = vector.load %arg7[%c0_24, %c0_25] : memref<12x4xf32, #tpu.memory_space<vmem>>, vector<12x4xf32>
    %cst_26 = arith.constant dense<0.000000e+00> : vector<32x4xf32>
    %55 = tpu.matmul %53, %54, %cst_26 {dimension_numbers = #tpu.dot_dimension_numbers<[1], [0], [0], [1], [0, 0, 1, 1], [], []>} : vector<32x12xf32>, vector<12x4xf32>, vector<32x4xf32> -> vector<32x4xf32>
    %c0_27 = arith.constant 0 : index
    %c0_28 = arith.constant 0 : index
    %56 = vector.load %arg8[%c0_27, %c0_28] : memref<1x4xf32, #tpu.memory_space<vmem>>, vector<1x4xf32>
    %57 = vector.broadcast %56 : vector<1x4xf32> to vector<32x4xf32>
    %58 = arith.addf %55, %57 : vector<32x4xf32>
    %cst_29 = arith.constant 0.000000e+00 : f32
    %59 = vector.broadcast %cst_29 : f32 to vector<32x4xf32>
    %60 = arith.maximumf %58, %59 : vector<32x4xf32>
    %61 = vector.extract_strided_slice %60 {offsets = [0, 0], sizes = [16, 4], strides = [1, 1]} : vector<32x4xf32> to vector<16x4xf32>
    %62 = vector.extract_strided_slice %60 {offsets = [16, 0], sizes = [16, 4], strides = [1, 1]} : vector<32x4xf32> to vector<16x4xf32>
    %63 = tpu.concatenate %61, %62 in 1 : vector<16x4xf32>, vector<16x4xf32> -> vector<16x8xf32>
    %c0_30 = arith.constant 0 : index
    %c0_31 = arith.constant 0 : index
    %c0_32 = arith.constant 0 : index
    %64 = vector.load %arg9[%c0_30, %c0_31, %c0_32] : memref<1x16x8xf32, #tpu.memory_space<vmem>>, vector<1x16x8xf32>
    %65 = vector.shape_cast %64 : vector<1x16x8xf32> to vector<16x8xf32>
    %66 = vector.shape_cast %63 : vector<16x8xf32> to vector<1x16x8xf32>
    tpu.vector_store %arg9[%c0_30, %c0_31, %c0_32], %66 {strides = array<i32>} : memref<1x16x8xf32, #tpu.memory_space<vmem>>, vector<1x16x8xf32>,
    return
  }
  func.func @transform_0(%arg0: i32) -> (i32, i32, i32) {
    %c0_i32 = arith.constant 0 : i32
    %c0_i32_0 = arith.constant 0 : i32
    %c0_i32_1 = arith.constant 0 : i32
    return %arg0, %c0_i32, %c0_i32_0 : i32, i32, i32
  }
  func.func @transform_1(%arg0: i32) -> (i32, i32, i32) {
    %c0_i32 = arith.constant 0 : i32
    %c0_i32_0 = arith.constant 0 : i32
    %c0_i32_1 = arith.constant 0 : i32
    return %arg0, %c0_i32, %c0_i32_0 : i32, i32, i32
  }
  func.func @transform_2(%arg0: i32) -> (i32, i32) {
    %c0_i32 = arith.constant 0 : i32
    %c0_i32_0 = arith.constant 0 : i32
    %c0_i32_1 = arith.constant 0 : i32
    return %c0_i32, %c0_i32_0 : i32, i32
  }
  func.func @transform_3(%arg0: i32) -> (i32, i32) {
    %c0_i32 = arith.constant 0 : i32
    %c0_i32_0 = arith.constant 0 : i32
    %c0_i32_1 = arith.constant 0 : i32
    return %c0_i32, %c0_i32_0 : i32, i32
  }
  func.func @transform_4(%arg0: i32) -> (i32, i32) {
    %c0_i32 = arith.constant 0 : i32
    %c0_i32_0 = arith.constant 0 : i32
    %c0_i32_1 = arith.constant 0 : i32
    return %c0_i32, %c0_i32_0 : i32, i32
  }
  func.func @transform_5(%arg0: i32) -> (i32, i32) {
    %c0_i32 = arith.constant 0 : i32
    %c0_i32_0 = arith.constant 0 : i32
    %c0_i32_1 = arith.constant 0 : i32
    return %c0_i32, %c0_i32_0 : i32, i32
  }
  func.func @transform_6(%arg0: i32) -> (i32, i32) {
    %c0_i32 = arith.constant 0 : i32
    %c0_i32_0 = arith.constant 0 : i32
    %c0_i32_1 = arith.constant 0 : i32
    return %c0_i32, %c0_i32_0 : i32, i32
  }
  func.func @transform_7(%arg0: i32) -> (i32, i32) {
    %c0_i32 = arith.constant 0 : i32
    %c0_i32_0 = arith.constant 0 : i32
    %c0_i32_1 = arith.constant 0 : i32
    return %c0_i32, %c0_i32_0 : i32, i32
  }
  func.func @transform_8(%arg0: i32) -> (i32, i32, i32) {
    %c0_i32 = arith.constant 0 : i32
    %c0_i32_0 = arith.constant 0 : i32
    %c0_i32_1 = arith.constant 0 : i32
    return %arg0, %c0_i32, %c0_i32_0 : i32, i32, i32
  }
}

module attributes {stable_mosaic.version = 11 : i64} {
  func.func @_fused_stage_kernel(%arg0: i32, %arg1: memref<1x8x16xf32, #tpu.memory_space<vmem>>, %arg2: memref<1x8x16xf32, #tpu.memory_space<vmem>>, %arg3: memref<16x16xf32, #tpu.memory_space<vmem>>, %arg4: memref<1x16xf32, #tpu.memory_space<vmem>>, %arg5: memref<48x8xf32, #tpu.memory_space<vmem>>, %arg6: memref<1x8xf32, #tpu.memory_space<vmem>>, %arg7: memref<24x8xf32, #tpu.memory_space<vmem>>, %arg8: memref<1x8xf32, #tpu.memory_space<vmem>>, %arg9: memref<1x8x16xf32, #tpu.memory_space<vmem>>) attributes {dimension_semantics = [#tpu.dimension_semantics<parallel>], iteration_bounds = array<i64: 2>, scalar_prefetch = 0 : i64, scratch_operands = 0 : i64, tpu.core_type = #tpu.core_type<tc>, window_params = [{transform_indices = @transform_0, window_bounds = array<i64: 1, 8, 16>}, {transform_indices = @transform_1, window_bounds = array<i64: 1, 8, 16>}, {pipeline_mode = #tpu.pipeline_mode<synchronous>, transform_indices = @transform_2, window_bounds = array<i64: 16, 16>}, {pipeline_mode = #tpu.pipeline_mode<synchronous>, transform_indices = @transform_3, window_bounds = array<i64: 1, 16>}, {pipeline_mode = #tpu.pipeline_mode<synchronous>, transform_indices = @transform_4, window_bounds = array<i64: 48, 8>}, {pipeline_mode = #tpu.pipeline_mode<synchronous>, transform_indices = @transform_5, window_bounds = array<i64: 1, 8>}, {pipeline_mode = #tpu.pipeline_mode<synchronous>, transform_indices = @transform_6, window_bounds = array<i64: 24, 8>}, {pipeline_mode = #tpu.pipeline_mode<synchronous>, transform_indices = @transform_7, window_bounds = array<i64: 1, 8>}, {transform_indices = @transform_8, window_bounds = array<i64: 1, 8, 16>}]} {
    %c0 = arith.constant 0 : index
    %c0_0 = arith.constant 0 : index
    %c0_1 = arith.constant 0 : index
    %0 = vector.load %arg1[%c0, %c0_0, %c0_1] : memref<1x8x16xf32, #tpu.memory_space<vmem>>, vector<1x8x16xf32>
    %1 = vector.shape_cast %0 : vector<1x8x16xf32> to vector<8x16xf32>
    %c0_2 = arith.constant 0 : index
    %c0_3 = arith.constant 0 : index
    %c0_4 = arith.constant 0 : index
    %2 = vector.load %arg2[%c0_2, %c0_3, %c0_4] : memref<1x8x16xf32, #tpu.memory_space<vmem>>, vector<1x8x16xf32>
    %3 = vector.shape_cast %2 : vector<1x8x16xf32> to vector<8x16xf32>
    %c0_5 = arith.constant 0 : index
    %c0_6 = arith.constant 0 : index
    %4 = vector.load %arg3[%c0_5, %c0_6] : memref<16x16xf32, #tpu.memory_space<vmem>>, vector<16x16xf32>
    %cst = arith.constant dense<0.000000e+00> : vector<8x16xf32>
    %5 = tpu.matmul %1, %4, %cst {dimension_numbers = #tpu.dot_dimension_numbers<[1], [0], [0], [1], [0, 0, 1, 1], [], []>} : vector<8x16xf32>, vector<16x16xf32>, vector<8x16xf32> -> vector<8x16xf32>
    %c0_7 = arith.constant 0 : index
    %c0_8 = arith.constant 0 : index
    %6 = vector.load %arg4[%c0_7, %c0_8] : memref<1x16xf32, #tpu.memory_space<vmem>>, vector<1x16xf32>
    %7 = vector.broadcast %6 : vector<1x16xf32> to vector<8x16xf32>
    %8 = arith.addf %5, %7 : vector<8x16xf32>
    %9 = vector.extract_strided_slice %8 {offsets = [0, 0], sizes = [8, 8], strides = [1, 1]} : vector<8x16xf32> to vector<8x8xf32>
    %10 = vector.extract_strided_slice %3 {offsets = [0, 0], sizes = [8, 8], strides = [1, 1]} : vector<8x16xf32> to vector<8x8xf32>
    %11 = tpu.concatenate %9, %10 in 1 : vector<8x8xf32>, vector<8x8xf32> -> vector<8x16xf32>
    %12 = vector.extract_strided_slice %8 {offsets = [0, 8], sizes = [8, 8], strides = [1, 1]} : vector<8x16xf32> to vector<8x8xf32>
    %13 = vector.extract_strided_slice %3 {offsets = [0, 8], sizes = [8, 8], strides = [1, 1]} : vector<8x16xf32> to vector<8x8xf32>
    %14 = tpu.concatenate %12, %13 in 1 : vector<8x8xf32>, vector<8x8xf32> -> vector<8x16xf32>
    %15 = tpu.iota {dimensions = array<i32: 0>} : vector<8x16xi32>
    %c0_i32 = arith.constant 0 : i32
    %16 = vector.broadcast %c0_i32 : i32 to vector<8x16xi32>
    %17 = arith.cmpi eq, %15, %16 : vector<8x16xi32>
    %c1_i32 = arith.constant 1 : i32
    %18 = tpu.dynamic_rotate %14 by %c1_i32 dim 0 : vector<8x16xf32>, i32 -> vector<8x16xf32>
    %cst_9 = arith.constant 0.000000e+00 : f32
    %19 = vector.broadcast %cst_9 : f32 to vector<8x16xf32>
    %20 = arith.select %17, %19, %18 : vector<8x16xi1>, vector<8x16xf32>
    %21 = tpu.concatenate %20, %11, %14 in 1 : vector<8x16xf32>, vector<8x16xf32>, vector<8x16xf32> -> vector<8x48xf32>
    %22 = tpu.iota {dimensions = array<i32: 0>} : vector<8x16xi32>
    %c7_i32 = arith.constant 7 : i32
    %23 = vector.broadcast %c7_i32 : i32 to vector<8x16xi32>
    %24 = arith.cmpi eq, %22, %23 : vector<8x16xi32>
    %c7_i32_10 = arith.constant 7 : i32
    %25 = tpu.dynamic_rotate %11 by %c7_i32_10 dim 0 : vector<8x16xf32>, i32 -> vector<8x16xf32>
    %cst_11 = arith.constant 0.000000e+00 : f32
    %26 = vector.broadcast %cst_11 : f32 to vector<8x16xf32>
    %27 = arith.select %24, %26, %25 : vector<8x16xi1>, vector<8x16xf32>
    %28 = tpu.concatenate %11, %14, %27 in 1 : vector<8x16xf32>, vector<8x16xf32>, vector<8x16xf32> -> vector<8x48xf32>
    %29 = tpu.concatenate %21, %28 in 0 : vector<8x48xf32>, vector<8x48xf32> -> vector<16x48xf32>
    %c0_12 = arith.constant 0 : index
    %c0_13 = arith.constant 0 : index
    %30 = vector.load %arg5[%c0_12, %c0_13] : memref<48x8xf32, #tpu.memory_space<vmem>>, vector<48x8xf32>
    %cst_14 = arith.constant dense<0.000000e+00> : vector<16x8xf32>
    %31 = tpu.matmul %29, %30, %cst_14 {dimension_numbers = #tpu.dot_dimension_numbers<[1], [0], [0], [1], [0, 0, 1, 1], [], []>} : vector<16x48xf32>, vector<48x8xf32>, vector<16x8xf32> -> vector<16x8xf32>
    %c0_15 = arith.constant 0 : index
    %c0_16 = arith.constant 0 : index
    %32 = vector.load %arg6[%c0_15, %c0_16] : memref<1x8xf32, #tpu.memory_space<vmem>>, vector<1x8xf32>
    %33 = vector.broadcast %32 : vector<1x8xf32> to vector<16x8xf32>
    %34 = arith.addf %31, %33 : vector<16x8xf32>
    %cst_17 = arith.constant 0.000000e+00 : f32
    %35 = vector.broadcast %cst_17 : f32 to vector<16x8xf32>
    %36 = arith.maximumf %34, %35 : vector<16x8xf32>
    %37 = vector.extract_strided_slice %36 {offsets = [0, 0], sizes = [8, 8], strides = [1, 1]} : vector<16x8xf32> to vector<8x8xf32>
    %38 = vector.extract_strided_slice %36 {offsets = [8, 0], sizes = [8, 8], strides = [1, 1]} : vector<16x8xf32> to vector<8x8xf32>
    %39 = tpu.iota {dimensions = array<i32: 0>} : vector<8x8xi32>
    %c0_i32_18 = arith.constant 0 : i32
    %40 = vector.broadcast %c0_i32_18 : i32 to vector<8x8xi32>
    %41 = arith.cmpi eq, %39, %40 : vector<8x8xi32>
    %c1_i32_19 = arith.constant 1 : i32
    %42 = tpu.dynamic_rotate %38 by %c1_i32_19 dim 0 : vector<8x8xf32>, i32 -> vector<8x8xf32>
    %cst_20 = arith.constant 0.000000e+00 : f32
    %43 = vector.broadcast %cst_20 : f32 to vector<8x8xf32>
    %44 = arith.select %41, %43, %42 : vector<8x8xi1>, vector<8x8xf32>
    %45 = tpu.concatenate %44, %37, %38 in 1 : vector<8x8xf32>, vector<8x8xf32>, vector<8x8xf32> -> vector<8x24xf32>
    %46 = tpu.iota {dimensions = array<i32: 0>} : vector<8x8xi32>
    %c7_i32_21 = arith.constant 7 : i32
    %47 = vector.broadcast %c7_i32_21 : i32 to vector<8x8xi32>
    %48 = arith.cmpi eq, %46, %47 : vector<8x8xi32>
    %c7_i32_22 = arith.constant 7 : i32
    %49 = tpu.dynamic_rotate %37 by %c7_i32_22 dim 0 : vector<8x8xf32>, i32 -> vector<8x8xf32>
    %cst_23 = arith.constant 0.000000e+00 : f32
    %50 = vector.broadcast %cst_23 : f32 to vector<8x8xf32>
    %51 = arith.select %48, %50, %49 : vector<8x8xi1>, vector<8x8xf32>
    %52 = tpu.concatenate %37, %38, %51 in 1 : vector<8x8xf32>, vector<8x8xf32>, vector<8x8xf32> -> vector<8x24xf32>
    %53 = tpu.concatenate %45, %52 in 0 : vector<8x24xf32>, vector<8x24xf32> -> vector<16x24xf32>
    %c0_24 = arith.constant 0 : index
    %c0_25 = arith.constant 0 : index
    %54 = vector.load %arg7[%c0_24, %c0_25] : memref<24x8xf32, #tpu.memory_space<vmem>>, vector<24x8xf32>
    %cst_26 = arith.constant dense<0.000000e+00> : vector<16x8xf32>
    %55 = tpu.matmul %53, %54, %cst_26 {dimension_numbers = #tpu.dot_dimension_numbers<[1], [0], [0], [1], [0, 0, 1, 1], [], []>} : vector<16x24xf32>, vector<24x8xf32>, vector<16x8xf32> -> vector<16x8xf32>
    %c0_27 = arith.constant 0 : index
    %c0_28 = arith.constant 0 : index
    %56 = vector.load %arg8[%c0_27, %c0_28] : memref<1x8xf32, #tpu.memory_space<vmem>>, vector<1x8xf32>
    %57 = vector.broadcast %56 : vector<1x8xf32> to vector<16x8xf32>
    %58 = arith.addf %55, %57 : vector<16x8xf32>
    %cst_29 = arith.constant 0.000000e+00 : f32
    %59 = vector.broadcast %cst_29 : f32 to vector<16x8xf32>
    %60 = arith.maximumf %58, %59 : vector<16x8xf32>
    %61 = vector.extract_strided_slice %60 {offsets = [0, 0], sizes = [8, 8], strides = [1, 1]} : vector<16x8xf32> to vector<8x8xf32>
    %62 = vector.extract_strided_slice %60 {offsets = [8, 0], sizes = [8, 8], strides = [1, 1]} : vector<16x8xf32> to vector<8x8xf32>
    %63 = tpu.concatenate %61, %62 in 1 : vector<8x8xf32>, vector<8x8xf32> -> vector<8x16xf32>
    %c0_30 = arith.constant 0 : index
    %c0_31 = arith.constant 0 : index
    %c0_32 = arith.constant 0 : index
    %64 = vector.load %arg9[%c0_30, %c0_31, %c0_32] : memref<1x8x16xf32, #tpu.memory_space<vmem>>, vector<1x8x16xf32>
    %65 = vector.shape_cast %64 : vector<1x8x16xf32> to vector<8x16xf32>
    %66 = vector.shape_cast %63 : vector<8x16xf32> to vector<1x8x16xf32>
    tpu.vector_store %arg9[%c0_30, %c0_31, %c0_32], %66 {strides = array<i32>} : memref<1x8x16xf32, #tpu.memory_space<vmem>>, vector<1x8x16xf32>,
    return
  }
  func.func @transform_0(%arg0: i32) -> (i32, i32, i32) {
    %c0_i32 = arith.constant 0 : i32
    %c0_i32_0 = arith.constant 0 : i32
    %c0_i32_1 = arith.constant 0 : i32
    return %arg0, %c0_i32, %c0_i32_0 : i32, i32, i32
  }
  func.func @transform_1(%arg0: i32) -> (i32, i32, i32) {
    %c0_i32 = arith.constant 0 : i32
    %c0_i32_0 = arith.constant 0 : i32
    %c0_i32_1 = arith.constant 0 : i32
    return %arg0, %c0_i32, %c0_i32_0 : i32, i32, i32
  }
  func.func @transform_2(%arg0: i32) -> (i32, i32) {
    %c0_i32 = arith.constant 0 : i32
    %c0_i32_0 = arith.constant 0 : i32
    %c0_i32_1 = arith.constant 0 : i32
    return %c0_i32, %c0_i32_0 : i32, i32
  }
  func.func @transform_3(%arg0: i32) -> (i32, i32) {
    %c0_i32 = arith.constant 0 : i32
    %c0_i32_0 = arith.constant 0 : i32
    %c0_i32_1 = arith.constant 0 : i32
    return %c0_i32, %c0_i32_0 : i32, i32
  }
  func.func @transform_4(%arg0: i32) -> (i32, i32) {
    %c0_i32 = arith.constant 0 : i32
    %c0_i32_0 = arith.constant 0 : i32
    %c0_i32_1 = arith.constant 0 : i32
    return %c0_i32, %c0_i32_0 : i32, i32
  }
  func.func @transform_5(%arg0: i32) -> (i32, i32) {
    %c0_i32 = arith.constant 0 : i32
    %c0_i32_0 = arith.constant 0 : i32
    %c0_i32_1 = arith.constant 0 : i32
    return %c0_i32, %c0_i32_0 : i32, i32
  }
  func.func @transform_6(%arg0: i32) -> (i32, i32) {
    %c0_i32 = arith.constant 0 : i32
    %c0_i32_0 = arith.constant 0 : i32
    %c0_i32_1 = arith.constant 0 : i32
    return %c0_i32, %c0_i32_0 : i32, i32
  }
  func.func @transform_7(%arg0: i32) -> (i32, i32) {
    %c0_i32 = arith.constant 0 : i32
    %c0_i32_0 = arith.constant 0 : i32
    %c0_i32_1 = arith.constant 0 : i32
    return %c0_i32, %c0_i32_0 : i32, i32
  }
  func.func @transform_8(%arg0: i32) -> (i32, i32, i32) {
    %c0_i32 = arith.constant 0 : i32
    %c0_i32_0 = arith.constant 0 : i32
    %c0_i32_1 = arith.constant 0 : i32
    return %arg0, %c0_i32, %c0_i32_0 : i32, i32, i32
  }
}

</mosaic_0001>

<llo_original>
// kernel: decoder_forward.2
$region0: #{decoder_forward.2}
  #allocation0 [shape = 'u32[]', space=smem, size = 0x4, offset = 0x4, fixed_abs, tag = 'smem constant byte address 0x4 - core index']
  #allocation1 [shape = 'u32[144,128]{1,0:T(1,128)}', space=vmem, size = 0x12000, scoped, tag = 'internal scratch']
  %s0 = inlined_call_operand.vmem [shape: f32[2,8,16], index: 0, kind: input, shape index: {}]
  %s1 = inlined_call_operand.vmem [shape: f32[2,8,16], index: 1, kind: input, shape index: {}]
  %s2 = inlined_call_operand.vmem [shape: f32[16,16], index: 2, kind: input, shape index: {}]
  %s3 = inlined_call_operand.vmem [shape: f32[1,16], index: 3, kind: input, shape index: {}]
  %s4 = inlined_call_operand.vmem [shape: f32[48,8], index: 4, kind: input, shape index: {}]
  %s5 = inlined_call_operand.vmem [shape: f32[1,8], index: 5, kind: input, shape index: {}]
  %s6 = inlined_call_operand.vmem [shape: f32[24,8], index: 6, kind: input, shape index: {}]
  %s7 = inlined_call_operand.vmem [shape: f32[1,8], index: 7, kind: input, shape index: {}]
  %s8 = inlined_call_operand.vmem [shape: f32[2,8,16], index: 8, kind: output, shape index: {}]
  %s9 = sld [smem:[#allocation0]]
  $region65: #{decoder_forward.2} parent=0
    _
  %s11 = ssub.s32 1, %s9
  %s12 = scalar_select 0, %s11, %s9
  loop: start=0, step=1, limit=4
  $region2: #{decoder_forward.2} parent=0 // loop_pre_header
    _
  $region3: #{decoder_forward.2} parent=0 // loop_header
    %s14 = sphi 0, %s18
    %p15 = scmp.ge.s32.totalorder %s14, 4
    %s24 = sphi 0, %s26
    %s27 = sphi 0, %s24
    %s28 = sphi 0, %s27
    %s44 = sphi 0, %s28
    %s50 = sphi 0, %s52
    %s53 = sphi 0, %s50
    %s54 = sphi 0, %s53
    %s70 = sphi 0, %s54
    %s74 = sphi 0, %s74
    %s76 = sphi 0, %s74
    %s77 = sphi 0, %s76
    %s91 = sphi 0, %s77
    %s95 = sphi 0, %s95
    %s97 = sphi 0, %s95
    %s98 = sphi 0, %s97
    %s112 = sphi 0, %s98
    %s116 = sphi 0, %s116
    %s118 = sphi 0, %s116
    %s119 = sphi 0, %s118
    %s133 = sphi 0, %s119
    %s137 = sphi 0, %s137
    %s139 = sphi 0, %s137
    %s140 = sphi 0, %s139
    %s154 = sphi 0, %s140
    %s158 = sphi 0, %s158
    %s160 = sphi 0, %s158
    %s161 = sphi 0, %s160
    %s175 = sphi 0, %s161
    %s179 = sphi 0, %s179
    %s181 = sphi 0, %s179
    %s182 = sphi 0, %s181
    %s196 = sphi 0, %s182
    %s202 = sphi 0, %s204
    %s205 = sphi 0, %s202
    %s206 = sphi 0, %s205
    %s222 = sphi 0, %s206
  $region4: #{decoder_forward.2} parent=0 // loop_header_branch
    %17 = sbr.rel (%p15) target = $region8
  $region5: #{decoder_forward.2} parent=0 // loop_body
    %s19 = ssub.s32 %s14, 1
    %s20 = ssub.s32 %s14, 2
    %s21 = sadd.s32 %s14, 1
    %s22 = ssub.s32 %s14, %s21
    %p23 = scmp.eq.s32.totalorder %s22, 0
    %s25 = sadd.s32 %s24, 1
    %s26 = scalar_select %p23, %s24, %s25
    %p29 = pneg %p23
    %p30 = scmp.eq.s32.totalorder %s14, 1
    %p31 = por %p29, %p30
    %p32 = scmp.ne.s32.totalorder %s24, %s27
    %p33 = scmp.eq.s32.totalorder %s14, 0
    %p34 = por %p32, %p33
    %p35 = scmp.ne.s32.totalorder %s24, %s27
    %p36 = scmp.eq.s32.totalorder %s19, 1
    %p37 = por %p35, %p36
    %p38 = scmp.ne.s32.totalorder %s27, %s28
    %p39 = scmp.eq.s32.totalorder %s19, 0
    %p40 = por %p38, %p39
    %p41 = scmp.ne.s32.totalorder %s27, %s28
    %p42 = scmp.eq.s32.totalorder %s20, 1
    %p43 = por %p41, %p42
    %p45 = scmp.ne.s32.totalorder %s28, %s44
    %p46 = scmp.eq.s32.totalorder %s20, 0
    %p47 = por %p45, %p46
    %s48 = ssub.s32 %s14, %s21
    %p49 = scmp.eq.s32.totalorder %s48, 0
    %s51 = sadd.s32 %s50, 1
    %s52 = scalar_select %p49, %s50, %s51
    %p55 = pneg %p49
    %p56 = scmp.eq.s32.totalorder %s14, 1
    %p57 = por %p55, %p56
    %p58 = scmp.ne.s32.totalorder %s50, %s53
    %p59 = scmp.eq.s32.totalorder %s14, 0
    %p60 = por %p58, %p59
    %p61 = scmp.ne.s32.totalorder %s50, %s53
    %p62 = scmp.eq.s32.totalorder %s19, 1
    %p63 = por %p61, %p62
    %p64 = scmp.ne.s32.totalorder %s53, %s54
    %p65 = scmp.eq.s32.totalorder %s19, 0
    %p66 = por %p64, %p65
    %p67 = scmp.ne.s32.totalorder %s53, %s54
    %p68 = scmp.eq.s32.totalorder %s20, 1
    %p69 = por %p67, %p68
    %p71 = scmp.ne.s32.totalorder %s54, %s70
    %p72 = scmp.eq.s32.totalorder %s20, 0
    %p73 = por %p71, %p72
    %s75 = sadd.s32 %s74, 1
    %p78 = scmp.eq.s32.totalorder %s14, 1
    %p79 = scmp.ne.s32.totalorder %s74, %s76
    %p80 = scmp.eq.s32.totalorder %s14, 0
    %p81 = por %p79, %p80
    %p82 = scmp.ne.s32.totalorder %s74, %s76
    %p83 = scmp.eq.s32.totalorder %s19, 1
    %p84 = por %p82, %p83
    %p85 = scmp.ne.s32.totalorder %s76, %s77
    %p86 = scmp.eq.s32.totalorder %s19, 0
    %p87 = por %p85, %p86
    %p88 = scmp.ne.s32.totalorder %s76, %s77
    %p89 = scmp.eq.s32.totalorder %s20, 1
    %p90 = por %p88, %p89
    %p92 = scmp.ne.s32.totalorder %s77, %s91
    %p93 = scmp.eq.s32.totalorder %s20, 0
    %p94 = por %p92, %p93
    %s96 = sadd.s32 %s95, 1
    %p99 = scmp.eq.s32.totalorder %s14, 1
    %p100 = scmp.ne.s32.totalorder %s95, %s97
    %p101 = scmp.eq.s32.totalorder %s14, 0
    %p102 = por %p100, %p101
    %p103 = scmp.ne.s32.totalorder %s95, %s97
    %p104 = scmp.eq.s32.totalorder %s19, 1
    %p105 = por %p103, %p104
    %p106 = scmp.ne.s32.totalorder %s97, %s98
    %p107 = scmp.eq.s32.totalorder %s19, 0
    %p108 = por %p106, %p107
    %p109 = scmp.ne.s32.totalorder %s97, %s98
    %p110 = scmp.eq.s32.totalorder %s20, 1
    %p111 = por %p109, %p110
    %p113 = scmp.ne.s32.totalorder %s98, %s112
    %p114 = scmp.eq.s32.totalorder %s20, 0
    %p115 = por %p113, %p114
    %s117 = sadd.s32 %s116, 1
    %p120 = scmp.eq.s32.totalorder %s14, 1
    %p121 = scmp.ne.s32.totalorder %s116, %s118
    %p122 = scmp.eq.s32.totalorder %s14, 0
    %p123 = por %p121, %p122
    %p124 = scmp.ne.s32.totalorder %s116, %s118
    %p125 = scmp.eq.s32.totalorder %s19, 1
    %p126 = por %p124, %p125
    %p127 = scmp.ne.s32.totalorder %s118, %s119
    %p128 = scmp.eq.s32.totalorder %s19, 0
    %p129 = por %p127, %p128
    %p130 = scmp.ne.s32.totalorder %s118, %s119
    %p131 = scmp.eq.s32.totalorder %s20, 1
    %p132 = por %p130, %p131
    %p134 = scmp.ne.s32.totalorder %s119, %s133
    %p135 = scmp.eq.s32.totalorder %s20, 0
    %p136 = por %p134, %p135
    %s138 = sadd.s32 %s137, 1
    %p141 = scmp.eq.s32.totalorder %s14, 1
    %p142 = scmp.ne.s32.totalorder %s137, %s139
    %p143 = scmp.eq.s32.totalorder %s14, 0
    %p144 = por %p142, %p143
    %p145 = scmp.ne.s32.totalorder %s137, %s139
    %p146 = scmp.eq.s32.totalorder %s19, 1
    %p147 = por %p145, %p146
    %p148 = scmp.ne.s32.totalorder %s139, %s140
    %p149 = scmp.eq.s32.totalorder %s19, 0
    %p150 = por %p148, %p149
    %p151 = scmp.ne.s32.totalorder %s139, %s140
    %p152 = scmp.eq.s32.totalorder %s20, 1
    %p153 = por %p151, %p152
    %p155 = scmp.ne.s32.totalorder %s140, %s154
    %p156 = scmp.eq.s32.totalorder %s20, 0
    %p157 = por %p155, %p156
    %s159 = sadd.s32 %s158, 1
    %p162 = scmp.eq.s32.totalorder %s14, 1
    %p163 = scmp.ne.s32.totalorder %s158, %s160
    %p164 = scmp.eq.s32.totalorder %s14, 0
    %p165 = por %p163, %p164
    %p166 = scmp.ne.s32.totalorder %s158, %s160
    %p167 = scmp.eq.s32.totalorder %s19, 1
    %p168 = por %p166, %p167
    %p169 = scmp.ne.s32.totalorder %s160, %s161
    %p170 = scmp.eq.s32.totalorder %s19, 0
    %p171 = por %p169, %p170
    %p172 = scmp.ne.s32.totalorder %s160, %s161
    %p173 = scmp.eq.s32.totalorder %s20, 1
    %p174 = por %p172, %p173
    %p176 = scmp.ne.s32.totalorder %s161, %s175
    %p177 = scmp.eq.s32.totalorder %s20, 0
    %p178 = por %p176, %p177
    %s180 = sadd.s32 %s179, 1
    %p183 = scmp.eq.s32.totalorder %s14, 1
    %p184 = scmp.ne.s32.totalorder %s179, %s181
    %p185 = scmp.eq.s32.totalorder %s14, 0
    %p186 = por %p184, %p185
    %p187 = scmp.ne.s32.totalorder %s179, %s181
    %p188 = scmp.eq.s32.totalorder %s19, 1
    %p189 = por %p187, %p188
    %p190 = scmp.ne.s32.totalorder %s181, %s182
    %p191 = scmp.eq.s32.totalorder %s19, 0
    %p192 = por %p190, %p191
    %p193 = scmp.ne.s32.totalorder %s181, %s182
    %p194 = scmp.eq.s32.totalorder %s20, 1
    %p195 = por %p193, %p194
    %p197 = scmp.ne.s32.totalorder %s182, %s196
    %p198 = scmp.eq.s32.totalorder %s20, 0
    %p199 = por %p197, %p198
    %s200 = ssub.s32 %s14, %s21
    %p201 = scmp.eq.s32.totalorder %s200, 0
    %s203 = sadd.s32 %s202, 1
    %s204 = scalar_select %p201, %s202, %s203
    %p207 = pneg %p201
    %p208 = scmp.eq.s32.totalorder %s14, 1
    %p209 = por %p207, %p208
    %p210 = scmp.ne.s32.totalorder %s202, %s205
    %p211 = scmp.eq.s32.totalorder %s14, 0
    %p212 = por %p210, %p211
    %p213 = scmp.ne.s32.totalorder %s202, %s205
    %p214 = scmp.eq.s32.totalorder %s19, 1
    %p215 = por %p213, %p214
    %p216 = scmp.ne.s32.totalorder %s205, %s206
    %p217 = scmp.eq.s32.totalorder %s19, 0
    %p218 = por %p216, %p217
    %p219 = scmp.ne.s32.totalorder %s205, %s206
    %p220 = scmp.eq.s32.totalorder %s20, 1
    %p221 = por %p219, %p220
    %p223 = scmp.ne.s32.totalorder %s206, %s222
    %p224 = scmp.eq.s32.totalorder %s20, 0
    %p225 = por %p223, %p224
    %p226 = scmp.le.s32.totalorder 1, %s14
    %p227 = scmp.lt.s32.totalorder %s14, 3
    %p228 = pnand %p226, %p227
    %p229 = pneg %p228
    // Predicated region
    $region9: #{decoder_forward.2} parent=5 // pred_check
      _
    $region10: #{decoder_forward.2} parent=5 // pred_check_branch
      %231 = sbr.rel (%p228) target = $region12
    $region11: #{decoder_forward.2} parent=5 // pred_region
      %s232 = ssub.s32 %s14, 1
      // Predicated region
      $region13: #{decoder_forward.2} parent=11 // pred_check
        %p233 = pneg %p87
      $region14: #{decoder_forward.2} parent=11 // pred_check_branch
        %235 = sbr.rel (%p233) target = $region16
      $region15: #{decoder_forward.2} parent=11 // pred_region
        _
      $region16: #{decoder_forward.2} parent=11 // pred_fallthru
        _
      // Predicated region
      $region17: #{decoder_forward.2} parent=11 // pred_check
        %p236 = pneg %p108
      $region18: #{decoder_forward.2} parent=11 // pred_check_branch
        %238 = sbr.rel (%p236) target = $region20
      $region19: #{decoder_forward.2} parent=11 // pred_region
        _
      $region20: #{decoder_forward.2} parent=11 // pred_fallthru
        _
      // Predicated region
      $region21: #{decoder_forward.2} parent=11 // pred_check
        %p239 = pneg %p129
      $region22: #{decoder_forward.2} parent=11 // pred_check_branch
        %241 = sbr.rel (%p239) target = $region24
      $region23: #{decoder_forward.2} parent=11 // pred_region
        _
      $region24: #{decoder_forward.2} parent=11 // pred_fallthru
        _
      // Predicated region
      $region25: #{decoder_forward.2} parent=11 // pred_check
        %p242 = pneg %p150
      $region26: #{decoder_forward.2} parent=11 // pred_check_branch
        %244 = sbr.rel (%p242) target = $region28
      $region27: #{decoder_forward.2} parent=11 // pred_region
        _
      $region28: #{decoder_forward.2} parent=11 // pred_fallthru
        _
      // Predicated region
      $region29: #{decoder_forward.2} parent=11 // pred_check
        %p245 = pneg %p171
      $region30: #{decoder_forward.2} parent=11 // pred_check_branch
        %247 = sbr.rel (%p245) target = $region32
      $region31: #{decoder_forward.2} parent=11 // pred_region
        _
      $region32: #{decoder_forward.2} parent=11 // pred_fallthru
        _
      // Predicated region
      $region33: #{decoder_forward.2} parent=11 // pred_check
        %p248 = pneg %p192
      $region34: #{decoder_forward.2} parent=11 // pred_check_branch
        %250 = sbr.rel (%p248) target = $region36
      $region35: #{decoder_forward.2} parent=11 // pred_region
        _
      $region36: #{decoder_forward.2} parent=11 // pred_fallthru
        _
    $region12: #{decoder_forward.2} parent=5 // pred_fallthru
      _
    %p251 = scmp.lt.s32.totalorder %s14, 2
    // Predicated region
    $region37: #{decoder_forward.2} parent=5 // pred_check
      %p252 = pneg %p251
    $region38: #{decoder_forward.2} parent=5 // pred_check_branch
      %254 = sbr.rel (%p252) target = $region40
    $region39: #{decoder_forward.2} parent=5 // pred_region
      // Predicated region
      $region41: #{decoder_forward.2} parent=39 // pred_check
        %p255 = pneg %p34
      $region42: #{decoder_forward.2} parent=39 // pred_check_branch
        %257 = sbr.rel (%p255) target = $region44
      $region43: #{decoder_forward.2} parent=39 // pred_region
        %p258 = scmp.lt.s32.totalorder %s14, 1
        %s259 = scalar_select %p258, %s14, 1
        %s260 = smul.addr %s259, 8
        %s261 = scalar_lea.vmem %s0, %s260
      $region44: #{decoder_forward.2} parent=39 // pred_fallthru
        _
      // Predicated region
      $region45: #{decoder_forward.2} parent=39 // pred_check
        %p262 = pneg %p60
      $region46: #{decoder_forward.2} parent=39 // pred_check_branch
        %264 = sbr.rel (%p262) target = $region48
      $region47: #{decoder_forward.2} parent=39 // pred_region
        %p265 = scmp.lt.s32.totalorder %s14, 1
        %s266 = scalar_select %p265, %s14, 1
        %s267 = smul.addr %s266, 8
        %s268 = scalar_lea.vmem %s1, %s267
      $region48: #{decoder_forward.2} parent=39 // pred_fallthru
        _
    $region40: #{decoder_forward.2} parent=5 // pred_fallthru
      _
    %p269 = scmp.le.s32.totalorder 1, %s14
    %p270 = scmp.lt.s32.totalorder %s14, 3
    %p271 = pnand %p269, %p270
    %p272 = pneg %p271
    // Predicated region
    $region49: #{decoder_forward.2} parent=5 // pred_check
      _
    $region50: #{decoder_forward.2} parent=5 // pred_check_branch
      %274 = sbr.rel (%p271) target = $region52
    $region51: #{decoder_forward.2} parent=5 // pred_region
      %s275 = ssub.s32 %s14, 1
      %p276 = scmp.lt.s32.totalorder %s19, 1
      %s277 = scalar_select %p276, %s19, 1
      %s278 = smul.addr %s277, 8
      %s279 = scalar_lea.vmem %s0, %s278
      %p280 = pneg %p40
      %p281 = pneg %p37
      %p282 = scmp.lt.s32.totalorder %s19, 1
      %s283 = scalar_select %p282, %s19, 1
      %s284 = smul.addr %s283, 8
      %s285 = scalar_lea.vmem %s1, %s284
      %p286 = pneg %p66
      %p287 = pneg %p63
      %p288 = pneg %p87
      %p289 = pneg %p84
      %p290 = pneg %p108
      %p291 = pneg %p105
      %p292 = pneg %p129
      %p293 = pneg %p126
      %p294 = pneg %p150
      %p295 = pneg %p147
      %p296 = pneg %p171
      %p297 = pneg %p168
      %p298 = pneg %p192
      %p299 = pneg %p189
      %p300 = pneg %p218
      %p301 = pneg %p215
      %p302 = scmp.lt.s32.totalorder %s19, 1
      %s303 = scalar_select %p302, %s19, 1
      %s304 = smul.addr %s303, 8
      %s305 = scalar_lea.vmem %s8, %s304
      %p306 = scmp.lt.s32.totalorder %s19, 1
      %s307 = scalar_select %p306, %s19, 1
      %s308 = smul.addr %s307, 8
      %s309 = scalar_lea.vmem %s0, %s308
      %p310 = scmp.lt.s32.totalorder %s19, 1
      %s311 = scalar_select %p310, %s19, 1
      %s312 = smul.addr %s311, 8
      %s313 = scalar_lea.vmem %s1, %s312
      %p314 = scmp.lt.s32.totalorder %s19, 1
      %s315 = scalar_select %p314, %s19, 1
      %s316 = smul.addr %s315, 8
      %s317 = scalar_lea.vmem %s8, %s316
      %v318 = vld [vmem:[%s309] sm:$0xff]
      %v319 = vld [vmem:[%s313] sm:$0xff]
      %v320 = vld [vmem:[%s2] sm:$0xff]
      %v321 = vld [vmem:[%s2 + $0x8] sm:$0xff]
      %v322 = vld [vmem:[%s3] sm:$0x1]
      %v324 = vlaneseq
      %v325 = vshrl.u32 %v324, 7
      %v326 = vsub.s32 0, %v325
      %v327 = vrot.slane %v322, %v326
      %vm329 = vcmask 130048
      %v331 = vsel %vm329, %v318, 0
      %333 = vmatprep.subr.mxu0 0.0
      %334 = vmatpush1.msra.mxu0 %v320
      %335 = vmatprep.subr.mxu0 0.0
      %336 = vmatpush1.msra.mxu0 %v321
      %337 = vmatprep.subr.mxu0 0.0
      %338 = vmatpush1.msra.mxu0 0.0
      %339 = vmatprep.subr.mxu0 0.0
      %340 = vmatpush1.msra.mxu0 0.0
      %341 = vmatprep.subr.mxu0 0.0
      %342 = vmatpush1.msra.mxu0 0.0
      %343 = vmatprep.subr.mxu0 0.0
      %344 = vmatpush1.msra.mxu0 0.0
      %345 = vmatprep.subr.mxu0 0.0
      %346 = vmatpush1.msra.mxu0 0.0
      %347 = vmatprep.subr.mxu0 0.0
      %348 = vmatpush1.msra.mxu0 0.0
      %349 = vmatprep.subr.mxu0 0.0
      %350 = vmatpush1.msra.mxu0 0.0
      %351 = vmatprep.subr.mxu0 0.0
      %352 = vmatpush1.msra.mxu0 0.0
      %353 = vmatprep.subr.mxu0 0.0
      %354 = vmatpush1.msra.mxu0 0.0
      %355 = vmatprep.subr.mxu0 0.0
      %356 = vmatpush1.msra.mxu0 0.0
      %357 = vmatprep.subr.mxu0 0.0
      %358 = vmatpush1.msra.mxu0 0.0
      %359 = vmatprep.subr.mxu0 0.0
      %360 = vmatpush1.msra.mxu0 0.0
      %361 = vmatprep.subr.mxu0 0.0
      %362 = vmatpush1.msra.mxu0 0.0
      %363 = vmatprep.subr.mxu0 0.0
      %364 = vmatpush1.msra.mxu0 0.0
      %365 = vmatprep.subr.mxu0 0.0
      %366 = vmatpush1.msra.mxu0 0.0
      %367 = vmatprep.subr.mxu0 0.0
      %368 = vmatpush1.msra.mxu0 0.0
      %369 = vmatprep.subr.mxu0 0.0
      %370 = vmatpush1.msra.mxu0 0.0
      %371 = vmatprep.subr.mxu0 0.0
      %372 = vmatpush1.msra.mxu0 0.0
      %373 = vmatprep.subr.mxu0 0.0
      %374 = vmatpush1.msra.mxu0 0.0
      %375 = vmatprep.subr.mxu0 0.0
      %376 = vmatpush1.msra.mxu0 0.0
      %377 = vmatprep.subr.mxu0 0.0
      %378 = vmatpush1.msra.mxu0 0.0
      %379 = vmatprep.subr.mxu0 0.0
      %380 = vmatpush1.msra.mxu0 0.0
      %381 = vmatprep.subr.mxu0 0.0
      %382 = vmatpush1.msra.mxu0 0.0
      %383 = vmatprep.subr.mxu0 0.0
      %384 = vmatpush1.msra.mxu0 0.0
      %385 = vmatprep.subr.mxu0 0.0
      %386 = vmatpush1.msra.mxu0 0.0
      %387 = vmatprep.subr.mxu0 0.0
      %388 = vmatpush1.msra.mxu0 0.0
      %389 = vmatprep.subr.mxu0 0.0
      %390 = vmatpush1.msra.mxu0 0.0
      %391 = vmatprep.subr.mxu0 0.0
      %392 = vmatpush1.msra.mxu0 0.0
      %393 = vmatprep.subr.mxu0 0.0
      %394 = vmatpush1.msra.mxu0 0.0
      %395 = vmatprep.subr.mxu0 0.0
      %396 = vmatpush1.msra.mxu0 0.0
      %397 = vmatprep.mubr.f32.mxu0 0.0
      %398 = vmatmul.mubr.f32.gmra.mrb[0].mxu0 %v331
      %v399 = vpop.f32.mrb[0].mxu0
      %v400 = vadd.f32 %v327, %v399
      %v401 = vpop.f32.mrb[0].mxu0
      %402 = vdwg.mxu0
      %404 = vrot.lane.b32.xlu0 %v319, 8
      %v405 = vpop.permute.xlu0 %404
      %vm407 = vcmask 64512
      %v408 = vsel %vm407, %v400, %v405
      %410 = vrot.lane.b32.xlu0 %v400, 120
      %v411 = vpop.permute.xlu0 %410
      %v413 = vsel %vm407, %v411, %v319
      %v414 = vlaneseq
      %v415 = vshrl.u32 %v414, 7
      %vm416 = vcmp.eq.s32.totalorder %v415, 0
      %v417 = vrot.slane %v413, 7
      %v418 = vsel %vm416, 0.0, %v417
      %420 = vrot.lane.b32.xlu0 %v408, 16
      %v421 = vpop.permute.xlu0 %420
      %424 = vrot.lane.b32.xlu0 %v413, 32
      %v425 = vpop.permute.xlu0 %424
      %v427 = vsel %vm329, %v418, %v421
      %vm428 = vcmask 261120
      %v429 = vsel %vm428, %v427, %v425
      %vm430 = vcmp.eq.s32.totalorder %v415, 7
      %v431 = vrot.slane %v408, 1
      %v432 = vsel %vm430, 0.0, %v431
      %433 = vrot.lane.b32.xlu0 %v413, 16
      %v434 = vpop.permute.xlu0 %433
      %437 = vrot.lane.b32.xlu0 %v432, 32
      %v438 = vpop.permute.xlu0 %437
      %v440 = vsel %vm329, %v408, %v434
      %v441 = vsel %vm428, %v440, %v438
      %v442 = vld [vmem:[%s4] sm:$0xff]
      %v443 = vld [vmem:[%s4 + $0x8] sm:$0xff]
      %v444 = vld [vmem:[%s4 + $0x10] sm:$0xff]
      %v445 = vld [vmem:[%s4 + $0x18] sm:$0xff]
      %v446 = vld [vmem:[%s4 + $0x20] sm:$0xff]
      %v447 = vld [vmem:[%s4 + $0x28] sm:$0xff]
      %v448 = vld [vmem:[%s5] sm:$0x1]
      %v450 = vlaneseq
      %v451 = vshrl.u32 %v450, 7
      %v452 = vsub.s32 0, %v451
      %v453 = vrot.slane %v448, %v452
      %vm455 = vcmask 392192
      %v457 = vsel %vm455, %v429, 0
      %v460 = vsel %vm455, %v441, 0
      %462 = vmatprep.subr.mxu0 0.0
      %463 = vmatpush1.msra.mxu0 %v442
      %464 = vmatprep.subr.mxu0 0.0
      %465 = vmatpush1.msra.mxu0 %v443
      %466 = vmatprep.subr.mxu0 0.0
      %467 = vmatpush1.msra.mxu0 %v444
      %468 = vmatprep.subr.mxu0 0.0
      %469 = vmatpush1.msra.mxu0 %v445
      %470 = vmatprep.subr.mxu0 0.0
      %471 = vmatpush1.msra.mxu0 %v446
      %472 = vmatprep.subr.mxu0 0.0
      %473 = vmatpush1.msra.mxu0 %v447
      %474 = vmatprep.subr.mxu0 0.0
      %475 = vmatpush1.msra.mxu0 0.0
      %476 = vmatprep.subr.mxu0 0.0
      %477 = vmatpush1.msra.mxu0 0.0
      %478 = vmatprep.subr.mxu0 0.0
      %479 = vmatpush1.msra.mxu0 0.0
      %480 = vmatprep.subr.mxu0 0.0
      %481 = vmatpush1.msra.mxu0 0.0
      %482 = vmatprep.subr.mxu0 0.0
      %483 = vmatpush1.msra.mxu0 0.0
      %484 = vmatprep.subr.mxu0 0.0
      %485 = vmatpush1.msra.mxu0 0.0
      %486 = vmatprep.subr.mxu0 0.0
      %487 = vmatpush1.msra.mxu0 0.0
      %488 = vmatprep.subr.mxu0 0.0
      %489 = vmatpush1.msra.mxu0 0.0
      %490 = vmatprep.subr.mxu0 0.0
      %491 = vmatpush1.msra.mxu0 0.0
      %492 = vmatprep.subr.mxu0 0.0
      %493 = vmatpush1.msra.mxu0 0.0
      %494 = vmatprep.subr.mxu0 0.0
      %495 = vmatpush1.msra.mxu0 0.0
      %496 = vmatprep.subr.mxu0 0.0
      %497 = vmatpush1.msra.mxu0 0.0
      %498 = vmatprep.subr.mxu0 0.0
      %499 = vmatpush1.msra.mxu0 0.0
      %500 = vmatprep.subr.mxu0 0.0
      %501 = vmatpush1.msra.mxu0 0.0
      %502 = vmatprep.subr.mxu0 0.0
      %503 = vmatpush1.msra.mxu0 0.0
      %504 = vmatprep.subr.mxu0 0.0
      %505 = vmatpush1.msra.mxu0 0.0
      %506 = vmatprep.subr.mxu0 0.0
      %507 = vmatpush1.msra.mxu0 0.0
      %508 = vmatprep.subr.mxu0 0.0
      %509 = vmatpush1.msra.mxu0 0.0
      %510 = vmatprep.subr.mxu0 0.0
      %511 = vmatpush1.msra.mxu0 0.0
      %512 = vmatprep.subr.mxu0 0.0
      %513 = vmatpush1.msra.mxu0 0.0
      %514 = vmatprep.subr.mxu0 0.0
      %515 = vmatpush1.msra.mxu0 0.0
      %516 = vmatprep.subr.mxu0 0.0
      %517 = vmatpush1.msra.mxu0 0.0
      %518 = vmatprep.subr.mxu0 0.0
      %519 = vmatpush1.msra.mxu0 0.0
      %520 = vmatprep.subr.mxu0 0.0
      %521 = vmatpush1.msra.mxu0 0.0
      %522 = vmatprep.subr.mxu0 0.0
      %523 = vmatpush1.msra.mxu0 0.0
      %524 = vmatprep.subr.mxu0 0.0
      %525 = vmatpush1.msra.mxu0 0.0
      %526 = vmatprep.mubr.f32.mxu0 0.0
      %527 = vmatmul.mubr.f32.gmra.mrb[0].mxu0 %v457
      %v528 = vpop.f32.mrb[0].mxu0
      %v529 = vadd.f32 %v453, %v528
      %v530 = vpop.f32.mrb[0].mxu0
      %531 = vmatprep.mubr.f32.mxu0 0.0
      %532 = vmatmul.mubr.f32.gmra.mrb[0].mxu0 %v460
      %v533 = vpop.f32.mrb[0].mxu0
      %v534 = vadd.f32 %v453, %v533
      %v535 = vpop.f32.mrb[0].mxu0
      %536 = vdwg.mxu0
      %v537 = vmax.f32 %v529, 0.0
      %v538 = vmax.f32 %v534, 0.0
      %v539 = vrot.slane %v538, 7
      %v540 = vsel %vm416, 0.0, %v539
      %542 = vrot.lane.b32.xlu0 %v537, 8
      %v543 = vpop.permute.xlu0 %542
      %546 = vrot.lane.b32.xlu0 %v538, 16
      %v547 = vpop.permute.xlu0 %546
      %v549 = vsel %vm407, %v540, %v543
      %v550 = vsel %vm329, %v549, %v547
      %v551 = vrot.slane %v537, 1
      %v552 = vsel %vm430, 0.0, %v551
      %553 = vrot.lane.b32.xlu0 %v538, 8
      %v554 = vpop.permute.xlu0 %553
      %557 = vrot.lane.b32.xlu0 %v552, 16
      %v558 = vpop.permute.xlu0 %557
      %v560 = vsel %vm407, %v537, %v554
      %v561 = vsel %vm329, %v560, %v558
      %v562 = vld [vmem:[%s6] sm:$0xff]
      %v563 = vld [vmem:[%s6 + $0x8] sm:$0xff]
      %v564 = vld [vmem:[%s6 + $0x10] sm:$0xff]
      %v565 = vld [vmem:[%s7] sm:$0x1]
      %v567 = vlaneseq
      %v568 = vshrl.u32 %v567, 7
      %v569 = vsub.s32 0, %v568
      %v570 = vrot.slane %v565, %v569
      %vm572 = vcmask 195584
      %v574 = vsel %vm572, %v550, 0
      %v577 = vsel %vm572, %v561, 0
      %579 = vmatprep.subr.mxu0 0.0
      %580 = vmatpush1.msra.mxu0 %v562
      %581 = vmatprep.subr.mxu0 0.0
      %582 = vmatpush1.msra.mxu0 %v563
      %583 = vmatprep.subr.mxu0 0.0
      %584 = vmatpush1.msra.mxu0 %v564
      %585 = vmatprep.subr.mxu0 0.0
      %586 = vmatpush1.msra.mxu0 0.0
      %587 = vmatprep.subr.mxu0 0.0
      %588 = vmatpush1.msra.mxu0 0.0
      %589 = vmatprep.subr.mxu0 0.0
      %590 = vmatpush1.msra.mxu0 0.0
      %591 = vmatprep.subr.mxu0 0.0
      %592 = vmatpush1.msra.mxu0 0.0
      %593 = vmatprep.subr.mxu0 0.0
      %594 = vmatpush1.msra.mxu0 0.0
      %595 = vmatprep.subr.mxu0 0.0
      %596 = vmatpush1.msra.mxu0 0.0
      %597 = vmatprep.subr.mxu0 0.0
      %598 = vmatpush1.msra.mxu0 0.0
      %599 = vmatprep.subr.mxu0 0.0
      %600 = vmatpush1.msra.mxu0 0.0
      %601 = vmatprep.subr.mxu0 0.0
      %602 = vmatpush1.msra.mxu0 0.0
      %603 = vmatprep.subr.mxu0 0.0
      %604 = vmatpush1.msra.mxu0 0.0
      %605 = vmatprep.subr.mxu0 0.0
      %606 = vmatpush1.msra.mxu0 0.0
      %607 = vmatprep.subr.mxu0 0.0
      %608 = vmatpush1.msra.mxu0 0.0
      %609 = vmatprep.subr.mxu0 0.0
      %610 = vmatpush1.msra.mxu0 0.0
      %611 = vmatprep.subr.mxu0 0.0
      %612 = vmatpush1.msra.mxu0 0.0
      %613 = vmatprep.subr.mxu0 0.0
      %614 = vmatpush1.msra.mxu0 0.0
      %615 = vmatprep.subr.mxu0 0.0
      %616 = vmatpush1.msra.mxu0 0.0
      %617 = vmatprep.subr.mxu0 0.0
      %618 = vmatpush1.msra.mxu0 0.0
      %619 = vmatprep.subr.mxu0 0.0
      %620 = vmatpush1.msra.mxu0 0.0
      %621 = vmatprep.subr.mxu0 0.0
      %622 = vmatpush1.msra.mxu0 0.0
      %623 = vmatprep.subr.mxu0 0.0
      %624 = vmatpush1.msra.mxu0 0.0
      %625 = vmatprep.subr.mxu0 0.0
      %626 = vmatpush1.msra.mxu0 0.0
      %627 = vmatprep.subr.mxu0 0.0
      %628 = vmatpush1.msra.mxu0 0.0
      %629 = vmatprep.subr.mxu0 0.0
      %630 = vmatpush1.msra.mxu0 0.0
      %631 = vmatprep.subr.mxu0 0.0
      %632 = vmatpush1.msra.mxu0 0.0
      %633 = vmatprep.subr.mxu0 0.0
      %634 = vmatpush1.msra.mxu0 0.0
      %635 = vmatprep.subr.mxu0 0.0
      %636 = vmatpush1.msra.mxu0 0.0
      %637 = vmatprep.subr.mxu0 0.0
      %638 = vmatpush1.msra.mxu0 0.0
      %639 = vmatprep.subr.mxu0 0.0
      %640 = vmatpush1.msra.mxu0 0.0
      %641 = vmatprep.subr.mxu0 0.0
      %642 = vmatpush1.msra.mxu0 0.0
      %643 = vmatprep.mubr.f32.mxu0 0.0
      %644 = vmatmul.mubr.f32.gmra.mrb[0].mxu0 %v574
      %v645 = vpop.f32.mrb[0].mxu0
      %v646 = vadd.f32 %v570, %v645
      %v647 = vpop.f32.mrb[0].mxu0
      %648 = vmatprep.mubr.f32.mxu0 0.0
      %649 = vmatmul.mubr.f32.gmra.mrb[0].mxu0 %v577
      %v650 = vpop.f32.mrb[0].mxu0
      %v651 = vadd.f32 %v570, %v650
      %v652 = vpop.f32.mrb[0].mxu0
      %653 = vdwg.mxu0
      %v654 = vmax.f32 %v646, 0.0
      %v655 = vmax.f32 %v651, 0.0
      %657 = vrot.lane.b32.xlu0 %v655, 8
      %v658 = vpop.permute.xlu0 %657
      %v660 = vsel %vm407, %v654, %v658
      %661 = vst.msk [vmem:[%s317] sm:$0xff] %vm329, %v660
      %p662 = scmp.lt.s32.totalorder %s19, 1
      %s663 = scalar_select %p662, %s19, 1
      %s664 = smul.addr %s663, 8
      %s665 = scalar_lea.vmem %s8, %s664
      // Predicated region
      $region53: #{decoder_forward.2} parent=51 // pred_check
        %p666 = pneg %p215
      $region54: #{decoder_forward.2} parent=51 // pred_check_branch
        %668 = sbr.rel (%p666) target = $region56
      $region55: #{decoder_forward.2} parent=51 // pred_region
        _
      $region56: #{decoder_forward.2} parent=51 // pred_fallthru
        _
    $region52: #{decoder_forward.2} parent=5 // pred_fallthru
      _
    %p669 = scmp.le.s32.totalorder 2, %s14
    // Predicated region
    $region57: #{decoder_forward.2} parent=5 // pred_check
      %p670 = pneg %p669
    $region58: #{decoder_forward.2} parent=5 // pred_check_branch
      %672 = sbr.rel (%p670) target = $region60
    $region59: #{decoder_forward.2} parent=5 // pred_region
      %s673 = ssub.s32 %s14, 2
      // Predicated region
      $region61: #{decoder_forward.2} parent=59 // pred_check
        %p674 = pneg %p221
      $region62: #{decoder_forward.2} parent=59 // pred_check_branch
        %676 = sbr.rel (%p674) target = $region64
      $region63: #{decoder_forward.2} parent=59 // pred_region
        %p677 = scmp.lt.s32.totalorder %s20, 1
        %s678 = scalar_select %p677, %s20, 1
        %s679 = smul.addr %s678, 8
        %s680 = scalar_lea.vmem %s8, %s679
      $region64: #{decoder_forward.2} parent=59 // pred_fallthru
        _
    $region60: #{decoder_forward.2} parent=5 // pred_fallthru
      _
  $region6: #{decoder_forward.2} parent=0 // loop_footer
    %s18 = sadd.s32 1, %s14
  $region7: #{decoder_forward.2} parent=0 // loop_footer_branch
    %13 = sbr.rel target = $region3
  $region8: #{decoder_forward.2} parent=0 // loop_exit
    _

// kernel: decoder_forward.3
$region0: #{decoder_forward.3}
  #allocation0 [shape = 'u32[]', space=smem, size = 0x4, offset = 0x4, fixed_abs, tag = 'smem constant byte address 0x4 - core index']
  #allocation1 [shape = 'u32[144,128]{1,0:T(1,128)}', space=vmem, size = 0x12000, scoped, tag = 'internal scratch']
  %s0 = inlined_call_operand.vmem [shape: f32[2,16,8], index: 0, kind: input, shape index: {}]
  %s1 = inlined_call_operand.vmem [shape: f32[2,16,8], index: 1, kind: input, shape index: {}]
  %s2 = inlined_call_operand.vmem [shape: f32[8,8], index: 2, kind: input, shape index: {}]
  %s3 = inlined_call_operand.vmem [shape: f32[1,8], index: 3, kind: input, shape index: {}]
  %s4 = inlined_call_operand.vmem [shape: f32[24,4], index: 4, kind: input, shape index: {}]
  %s5 = inlined_call_operand.vmem [shape: f32[1,4], index: 5, kind: input, shape index: {}]
  %s6 = inlined_call_operand.vmem [shape: f32[12,4], index: 6, kind: input, shape index: {}]
  %s7 = inlined_call_operand.vmem [shape: f32[1,4], index: 7, kind: input, shape index: {}]
  %s8 = inlined_call_operand.vmem [shape: f32[2,16,8], index: 8, kind: output, shape index: {}]
  %s9 = sld [smem:[#allocation0]]
  $region65: #{decoder_forward.3} parent=0
    _
  %s11 = ssub.s32 1, %s9
  %s12 = scalar_select 0, %s11, %s9
  loop: start=0, step=1, limit=4
  $region2: #{decoder_forward.3} parent=0 // loop_pre_header
    _
  $region3: #{decoder_forward.3} parent=0 // loop_header
    %s14 = sphi 0, %s18
    %p15 = scmp.ge.s32.totalorder %s14, 4
    %s24 = sphi 0, %s26
    %s27 = sphi 0, %s24
    %s28 = sphi 0, %s27
    %s44 = sphi 0, %s28
    %s50 = sphi 0, %s52
    %s53 = sphi 0, %s50
    %s54 = sphi 0, %s53
    %s70 = sphi 0, %s54
    %s74 = sphi 0, %s74
    %s76 = sphi 0, %s74
    %s77 = sphi 0, %s76
    %s91 = sphi 0, %s77
    %s95 = sphi 0, %s95
    %s97 = sphi 0, %s95
    %s98 = sphi 0, %s97
    %s112 = sphi 0, %s98
    %s116 = sphi 0, %s116
    %s118 = sphi 0, %s116
    %s119 = sphi 0, %s118
    %s133 = sphi 0, %s119
    %s137 = sphi 0, %s137
    %s139 = sphi 0, %s137
    %s140 = sphi 0, %s139
    %s154 = sphi 0, %s140
    %s158 = sphi 0, %s158
    %s160 = sphi 0, %s158
    %s161 = sphi 0, %s160
    %s175 = sphi 0, %s161
    %s179 = sphi 0, %s179
    %s181 = sphi 0, %s179
    %s182 = sphi 0, %s181
    %s196 = sphi 0, %s182
    %s202 = sphi 0, %s204
    %s205 = sphi 0, %s202
    %s206 = sphi 0, %s205
    %s222 = sphi 0, %s206
  $region4: #{decoder_forward.3} parent=0 // loop_header_branch
    %17 = sbr.rel (%p15) target = $region8
  $region5: #{decoder_forward.3} parent=0 // loop_body
    %s19 = ssub.s32 %s14, 1
    %s20 = ssub.s32 %s14, 2
    %s21 = sadd.s32 %s14, 1
    %s22 = ssub.s32 %s14, %s21
    %p23 = scmp.eq.s32.totalorder %s22, 0
    %s25 = sadd.s32 %s24, 1
    %s26 = scalar_select %p23, %s24, %s25
    %p29 = pneg %p23
    %p30 = scmp.eq.s32.totalorder %s14, 1
    %p31 = por %p29, %p30
    %p32 = scmp.ne.s32.totalorder %s24, %s27
    %p33 = scmp.eq.s32.totalorder %s14, 0
    %p34 = por %p32, %p33
    %p35 = scmp.ne.s32.totalorder %s24, %s27
    %p36 = scmp.eq.s32.totalorder %s19, 1
    %p37 = por %p35, %p36
    %p38 = scmp.ne.s32.totalorder %s27, %s28
    %p39 = scmp.eq.s32.totalorder %s19, 0
    %p40 = por %p38, %p39
    %p41 = scmp.ne.s32.totalorder %s27, %s28
    %p42 = scmp.eq.s32.totalorder %s20, 1
    %p43 = por %p41, %p42
    %p45 = scmp.ne.s32.totalorder %s28, %s44
    %p46 = scmp.eq.s32.totalorder %s20, 0
    %p47 = por %p45, %p46
    %s48 = ssub.s32 %s14, %s21
    %p49 = scmp.eq.s32.totalorder %s48, 0
    %s51 = sadd.s32 %s50, 1
    %s52 = scalar_select %p49, %s50, %s51
    %p55 = pneg %p49
    %p56 = scmp.eq.s32.totalorder %s14, 1
    %p57 = por %p55, %p56
    %p58 = scmp.ne.s32.totalorder %s50, %s53
    %p59 = scmp.eq.s32.totalorder %s14, 0
    %p60 = por %p58, %p59
    %p61 = scmp.ne.s32.totalorder %s50, %s53
    %p62 = scmp.eq.s32.totalorder %s19, 1
    %p63 = por %p61, %p62
    %p64 = scmp.ne.s32.totalorder %s53, %s54
    %p65 = scmp.eq.s32.totalorder %s19, 0
    %p66 = por %p64, %p65
    %p67 = scmp.ne.s32.totalorder %s53, %s54
    %p68 = scmp.eq.s32.totalorder %s20, 1
    %p69 = por %p67, %p68
    %p71 = scmp.ne.s32.totalorder %s54, %s70
    %p72 = scmp.eq.s32.totalorder %s20, 0
    %p73 = por %p71, %p72
    %s75 = sadd.s32 %s74, 1
    %p78 = scmp.eq.s32.totalorder %s14, 1
    %p79 = scmp.ne.s32.totalorder %s74, %s76
    %p80 = scmp.eq.s32.totalorder %s14, 0
    %p81 = por %p79, %p80
    %p82 = scmp.ne.s32.totalorder %s74, %s76
    %p83 = scmp.eq.s32.totalorder %s19, 1
    %p84 = por %p82, %p83
    %p85 = scmp.ne.s32.totalorder %s76, %s77
    %p86 = scmp.eq.s32.totalorder %s19, 0
    %p87 = por %p85, %p86
    %p88 = scmp.ne.s32.totalorder %s76, %s77
    %p89 = scmp.eq.s32.totalorder %s20, 1
    %p90 = por %p88, %p89
    %p92 = scmp.ne.s32.totalorder %s77, %s91
    %p93 = scmp.eq.s32.totalorder %s20, 0
    %p94 = por %p92, %p93
    %s96 = sadd.s32 %s95, 1
    %p99 = scmp.eq.s32.totalorder %s14, 1
    %p100 = scmp.ne.s32.totalorder %s95, %s97
    %p101 = scmp.eq.s32.totalorder %s14, 0
    %p102 = por %p100, %p101
    %p103 = scmp.ne.s32.totalorder %s95, %s97
    %p104 = scmp.eq.s32.totalorder %s19, 1
    %p105 = por %p103, %p104
    %p106 = scmp.ne.s32.totalorder %s97, %s98
    %p107 = scmp.eq.s32.totalorder %s19, 0
    %p108 = por %p106, %p107
    %p109 = scmp.ne.s32.totalorder %s97, %s98
    %p110 = scmp.eq.s32.totalorder %s20, 1
    %p111 = por %p109, %p110
    %p113 = scmp.ne.s32.totalorder %s98, %s112
    %p114 = scmp.eq.s32.totalorder %s20, 0
    %p115 = por %p113, %p114
    %s117 = sadd.s32 %s116, 1
    %p120 = scmp.eq.s32.totalorder %s14, 1
    %p121 = scmp.ne.s32.totalorder %s116, %s118
    %p122 = scmp.eq.s32.totalorder %s14, 0
    %p123 = por %p121, %p122
    %p124 = scmp.ne.s32.totalorder %s116, %s118
    %p125 = scmp.eq.s32.totalorder %s19, 1
    %p126 = por %p124, %p125
    %p127 = scmp.ne.s32.totalorder %s118, %s119
    %p128 = scmp.eq.s32.totalorder %s19, 0
    %p129 = por %p127, %p128
    %p130 = scmp.ne.s32.totalorder %s118, %s119
    %p131 = scmp.eq.s32.totalorder %s20, 1
    %p132 = por %p130, %p131
    %p134 = scmp.ne.s32.totalorder %s119, %s133
    %p135 = scmp.eq.s32.totalorder %s20, 0
    %p136 = por %p134, %p135
    %s138 = sadd.s32 %s137, 1
    %p141 = scmp.eq.s32.totalorder %s14, 1
    %p142 = scmp.ne.s32.totalorder %s137, %s139
    %p143 = scmp.eq.s32.totalorder %s14, 0
    %p144 = por %p142, %p143
    %p145 = scmp.ne.s32.totalorder %s137, %s139
    %p146 = scmp.eq.s32.totalorder %s19, 1
    %p147 = por %p145, %p146
    %p148 = scmp.ne.s32.totalorder %s139, %s140
    %p149 = scmp.eq.s32.totalorder %s19, 0
    %p150 = por %p148, %p149
    %p151 = scmp.ne.s32.totalorder %s139, %s140
    %p152 = scmp.eq.s32.totalorder %s20, 1
    %p153 = por %p151, %p152
    %p155 = scmp.ne.s32.totalorder %s140, %s154
    %p156 = scmp.eq.s32.totalorder %s20, 0
    %p157 = por %p155, %p156
    %s159 = sadd.s32 %s158, 1
    %p162 = scmp.eq.s32.totalorder %s14, 1
    %p163 = scmp.ne.s32.totalorder %s158, %s160
    %p164 = scmp.eq.s32.totalorder %s14, 0
    %p165 = por %p163, %p164
    %p166 = scmp.ne.s32.totalorder %s158, %s160
    %p167 = scmp.eq.s32.totalorder %s19, 1
    %p168 = por %p166, %p167
    %p169 = scmp.ne.s32.totalorder %s160, %s161
    %p170 = scmp.eq.s32.totalorder %s19, 0
    %p171 = por %p169, %p170
    %p172 = scmp.ne.s32.totalorder %s160, %s161
    %p173 = scmp.eq.s32.totalorder %s20, 1
    %p174 = por %p172, %p173
    %p176 = scmp.ne.s32.totalorder %s161, %s175
    %p177 = scmp.eq.s32.totalorder %s20, 0
    %p178 = por %p176, %p177
    %s180 = sadd.s32 %s179, 1
    %p183 = scmp.eq.s32.totalorder %s14, 1
    %p184 = scmp.ne.s32.totalorder %s179, %s181
    %p185 = scmp.eq.s32.totalorder %s14, 0
    %p186 = por %p184, %p185
    %p187 = scmp.ne.s32.totalorder %s179, %s181
    %p188 = scmp.eq.s32.totalorder %s19, 1
    %p189 = por %p187, %p188
    %p190 = scmp.ne.s32.totalorder %s181, %s182
    %p191 = scmp.eq.s32.totalorder %s19, 0
    %p192 = por %p190, %p191
    %p193 = scmp.ne.s32.totalorder %s181, %s182
    %p194 = scmp.eq.s32.totalorder %s20, 1
    %p195 = por %p193, %p194
    %p197 = scmp.ne.s32.totalorder %s182, %s196
    %p198 = scmp.eq.s32.totalorder %s20, 0
    %p199 = por %p197, %p198
    %s200 = ssub.s32 %s14, %s21
    %p201 = scmp.eq.s32.totalorder %s200, 0
    %s203 = sadd.s32 %s202, 1
    %s204 = scalar_select %p201, %s202, %s203
    %p207 = pneg %p201
    %p208 = scmp.eq.s32.totalorder %s14, 1
    %p209 = por %p207, %p208
    %p210 = scmp.ne.s32.totalorder %s202, %s205
    %p211 = scmp.eq.s32.totalorder %s14, 0
    %p212 = por %p210, %p211
    %p213 = scmp.ne.s32.totalorder %s202, %s205
    %p214 = scmp.eq.s32.totalorder %s19, 1
    %p215 = por %p213, %p214
    %p216 = scmp.ne.s32.totalorder %s205, %s206
    %p217 = scmp.eq.s32.totalorder %s19, 0
    %p218 = por %p216, %p217
    %p219 = scmp.ne.s32.totalorder %s205, %s206
    %p220 = scmp.eq.s32.totalorder %s20, 1
    %p221 = por %p219, %p220
    %p223 = scmp.ne.s32.totalorder %s206, %s222
    %p224 = scmp.eq.s32.totalorder %s20, 0
    %p225 = por %p223, %p224
    %p226 = scmp.le.s32.totalorder 1, %s14
    %p227 = scmp.lt.s32.totalorder %s14, 3
    %p228 = pnand %p226, %p227
    %p229 = pneg %p228
    // Predicated region
    $region9: #{decoder_forward.3} parent=5 // pred_check
      _
    $region10: #{decoder_forward.3} parent=5 // pred_check_branch
      %231 = sbr.rel (%p228) target = $region12
    $region11: #{decoder_forward.3} parent=5 // pred_region
      %s232 = ssub.s32 %s14, 1
      // Predicated region
      $region13: #{decoder_forward.3} parent=11 // pred_check
        %p233 = pneg %p87
      $region14: #{decoder_forward.3} parent=11 // pred_check_branch
        %235 = sbr.rel (%p233) target = $region16
      $region15: #{decoder_forward.3} parent=11 // pred_region
        _
      $region16: #{decoder_forward.3} parent=11 // pred_fallthru
        _
      // Predicated region
      $region17: #{decoder_forward.3} parent=11 // pred_check
        %p236 = pneg %p108
      $region18: #{decoder_forward.3} parent=11 // pred_check_branch
        %238 = sbr.rel (%p236) target = $region20
      $region19: #{decoder_forward.3} parent=11 // pred_region
        _
      $region20: #{decoder_forward.3} parent=11 // pred_fallthru
        _
      // Predicated region
      $region21: #{decoder_forward.3} parent=11 // pred_check
        %p239 = pneg %p129
      $region22: #{decoder_forward.3} parent=11 // pred_check_branch
        %241 = sbr.rel (%p239) target = $region24
      $region23: #{decoder_forward.3} parent=11 // pred_region
        _
      $region24: #{decoder_forward.3} parent=11 // pred_fallthru
        _
      // Predicated region
      $region25: #{decoder_forward.3} parent=11 // pred_check
        %p242 = pneg %p150
      $region26: #{decoder_forward.3} parent=11 // pred_check_branch
        %244 = sbr.rel (%p242) target = $region28
      $region27: #{decoder_forward.3} parent=11 // pred_region
        _
      $region28: #{decoder_forward.3} parent=11 // pred_fallthru
        _
      // Predicated region
      $region29: #{decoder_forward.3} parent=11 // pred_check
        %p245 = pneg %p171
      $region30: #{decoder_forward.3} parent=11 // pred_check_branch
        %247 = sbr.rel (%p245) target = $region32
      $region31: #{decoder_forward.3} parent=11 // pred_region
        _
      $region32: #{decoder_forward.3} parent=11 // pred_fallthru
        _
      // Predicated region
      $region33: #{decoder_forward.3} parent=11 // pred_check
        %p248 = pneg %p192
      $region34: #{decoder_forward.3} parent=11 // pred_check_branch
        %250 = sbr.rel (%p248) target = $region36
      $region35: #{decoder_forward.3} parent=11 // pred_region
        _
      $region36: #{decoder_forward.3} parent=11 // pred_fallthru
        _
    $region12: #{decoder_forward.3} parent=5 // pred_fallthru
      _
    %p251 = scmp.lt.s32.totalorder %s14, 2
    // Predicated region
    $region37: #{decoder_forward.3} parent=5 // pred_check
      %p252 = pneg %p251
    $region38: #{decoder_forward.3} parent=5 // pred_check_branch
      %254 = sbr.rel (%p252) target = $region40
    $region39: #{decoder_forward.3} parent=5 // pred_region
      // Predicated region
      $region41: #{decoder_forward.3} parent=39 // pred_check
        %p255 = pneg %p34
      $region42: #{decoder_forward.3} parent=39 // pred_check_branch
        %257 = sbr.rel (%p255) target = $region44
      $region43: #{decoder_forward.3} parent=39 // pred_region
        %p258 = scmp.lt.s32.totalorder %s14, 1
        %s259 = scalar_select %p258, %s14, 1
        %s260 = smul.addr %s259, 2
        %s261 = smul.addr %s260, 8
        %s262 = scalar_lea.vmem %s0, %s261
      $region44: #{decoder_forward.3} parent=39 // pred_fallthru
        _
      // Predicated region
      $region45: #{decoder_forward.3} parent=39 // pred_check
        %p263 = pneg %p60
      $region46: #{decoder_forward.3} parent=39 // pred_check_branch
        %265 = sbr.rel (%p263) target = $region48
      $region47: #{decoder_forward.3} parent=39 // pred_region
        %p266 = scmp.lt.s32.totalorder %s14, 1
        %s267 = scalar_select %p266, %s14, 1
        %s268 = smul.addr %s267, 2
        %s269 = smul.addr %s268, 8
        %s270 = scalar_lea.vmem %s1, %s269
      $region48: #{decoder_forward.3} parent=39 // pred_fallthru
        _
    $region40: #{decoder_forward.3} parent=5 // pred_fallthru
      _
    %p271 = scmp.le.s32.totalorder 1, %s14
    %p272 = scmp.lt.s32.totalorder %s14, 3
    %p273 = pnand %p271, %p272
    %p274 = pneg %p273
    // Predicated region
    $region49: #{decoder_forward.3} parent=5 // pred_check
      _
    $region50: #{decoder_forward.3} parent=5 // pred_check_branch
      %276 = sbr.rel (%p273) target = $region52
    $region51: #{decoder_forward.3} parent=5 // pred_region
      %s277 = ssub.s32 %s14, 1
      %p278 = scmp.lt.s32.totalorder %s19, 1
      %s279 = scalar_select %p278, %s19, 1
      %s280 = smul.addr %s279, 2
      %s281 = smul.addr %s280, 8
      %s282 = scalar_lea.vmem %s0, %s281
      %p283 = pneg %p40
      %p284 = pneg %p37
      %p285 = scmp.lt.s32.totalorder %s19, 1
      %s286 = scalar_select %p285, %s19, 1
      %s287 = smul.addr %s286, 2
      %s288 = smul.addr %s287, 8
      %s289 = scalar_lea.vmem %s1, %s288
      %p290 = pneg %p66
      %p291 = pneg %p63
      %p292 = pneg %p87
      %p293 = pneg %p84
      %p294 = pneg %p108
      %p295 = pneg %p105
      %p296 = pneg %p129
      %p297 = pneg %p126
      %p298 = pneg %p150
      %p299 = pneg %p147
      %p300 = pneg %p171
      %p301 = pneg %p168
      %p302 = pneg %p192
      %p303 = pneg %p189
      %p304 = pneg %p218
      %p305 = pneg %p215
      %p306 = scmp.lt.s32.totalorder %s19, 1
      %s307 = scalar_select %p306, %s19, 1
      %s308 = smul.addr %s307, 2
      %s309 = smul.addr %s308, 8
      %s310 = scalar_lea.vmem %s8, %s309
      %p311 = scmp.lt.s32.totalorder %s19, 1
      %s312 = scalar_select %p311, %s19, 1
      %s313 = smul.addr %s312, 2
      %s314 = smul.addr %s313, 8
      %s315 = scalar_lea.vmem %s0, %s314
      %p316 = scmp.lt.s32.totalorder %s19, 1
      %s317 = scalar_select %p316, %s19, 1
      %s318 = smul.addr %s317, 2
      %s319 = smul.addr %s318, 8
      %s320 = scalar_lea.vmem %s1, %s319
      %p321 = scmp.lt.s32.totalorder %s19, 1
      %s322 = scalar_select %p321, %s19, 1
      %s323 = smul.addr %s322, 2
      %s324 = smul.addr %s323, 8
      %s325 = scalar_lea.vmem %s8, %s324
      %v326 = vld [vmem:[%s315] sm:$0xff]
      %v327 = vld [vmem:[%s315 + $0x8] sm:$0xff]
      %v328 = vld [vmem:[%s320] sm:$0xff]
      %v329 = vld [vmem:[%s320 + $0x8] sm:$0xff]
      %v330 = vld [vmem:[%s2] sm:$0xff]
      %v331 = vld [vmem:[%s3] sm:$0x1]
      %v333 = vlaneseq
      %v334 = vshrl.u32 %v333, 7
      %v335 = vsub.s32 0, %v334
      %v336 = vrot.slane %v331, %v335
      %vm338 = vcmask 64512
      %v340 = vsel %vm338, %v326, 0
      %v343 = vsel %vm338, %v327, 0
      %345 = vmatprep.subr.mxu0 0.0
      %346 = vmatpush1.msra.mxu0 %v330
      %347 = vmatprep.subr.mxu0 0.0
      %348 = vmatpush1.msra.mxu0 0.0
      %349 = vmatprep.subr.mxu0 0.0
      %350 = vmatpush1.msra.mxu0 0.0
      %351 = vmatprep.subr.mxu0 0.0
      %352 = vmatpush1.msra.mxu0 0.0
      %353 = vmatprep.subr.mxu0 0.0
      %354 = vmatpush1.msra.mxu0 0.0
      %355 = vmatprep.subr.mxu0 0.0
      %356 = vmatpush1.msra.mxu0 0.0
      %357 = vmatprep.subr.mxu0 0.0
      %358 = vmatpush1.msra.mxu0 0.0
      %359 = vmatprep.subr.mxu0 0.0
      %360 = vmatpush1.msra.mxu0 0.0
      %361 = vmatprep.subr.mxu0 0.0
      %362 = vmatpush1.msra.mxu0 0.0
      %363 = vmatprep.subr.mxu0 0.0
      %364 = vmatpush1.msra.mxu0 0.0
      %365 = vmatprep.subr.mxu0 0.0
      %366 = vmatpush1.msra.mxu0 0.0
      %367 = vmatprep.subr.mxu0 0.0
      %368 = vmatpush1.msra.mxu0 0.0
      %369 = vmatprep.subr.mxu0 0.0
      %370 = vmatpush1.msra.mxu0 0.0
      %371 = vmatprep.subr.mxu0 0.0
      %372 = vmatpush1.msra.mxu0 0.0
      %373 = vmatprep.subr.mxu0 0.0
      %374 = vmatpush1.msra.mxu0 0.0
      %375 = vmatprep.subr.mxu0 0.0
      %376 = vmatpush1.msra.mxu0 0.0
      %377 = vmatprep.subr.mxu0 0.0
      %378 = vmatpush1.msra.mxu0 0.0
      %379 = vmatprep.subr.mxu0 0.0
      %380 = vmatpush1.msra.mxu0 0.0
      %381 = vmatprep.subr.mxu0 0.0
      %382 = vmatpush1.msra.mxu0 0.0
      %383 = vmatprep.subr.mxu0 0.0
      %384 = vmatpush1.msra.mxu0 0.0
      %385 = vmatprep.subr.mxu0 0.0
      %386 = vmatpush1.msra.mxu0 0.0
      %387 = vmatprep.subr.mxu0 0.0
      %388 = vmatpush1.msra.mxu0 0.0
      %389 = vmatprep.subr.mxu0 0.0
      %390 = vmatpush1.msra.mxu0 0.0
      %391 = vmatprep.subr.mxu0 0.0
      %392 = vmatpush1.msra.mxu0 0.0
      %393 = vmatprep.subr.mxu0 0.0
      %394 = vmatpush1.msra.mxu0 0.0
      %395 = vmatprep.subr.mxu0 0.0
      %396 = vmatpush1.msra.mxu0 0.0
      %397 = vmatprep.subr.mxu0 0.0
      %398 = vmatpush1.msra.mxu0 0.0
      %399 = vmatprep.subr.mxu0 0.0
      %400 = vmatpush1.msra.mxu0 0.0
      %401 = vmatprep.subr.mxu0 0.0
      %402 = vmatpush1.msra.mxu0 0.0
      %403 = vmatprep.subr.mxu0 0.0
      %404 = vmatpush1.msra.mxu0 0.0
      %405 = vmatprep.subr.mxu0 0.0
      %406 = vmatpush1.msra.mxu0 0.0
      %407 = vmatprep.subr.mxu0 0.0
      %408 = vmatpush1.msra.mxu0 0.0
      %409 = vmatprep.mubr.f32.mxu0 0.0
      %410 = vmatmul.mubr.f32.gmra.mrb[0].mxu0 %v340
      %v411 = vpop.f32.mrb[0].mxu0
      %v412 = vadd.f32 %v336, %v411
      %v413 = vpop.f32.mrb[0].mxu0
      %414 = vmatprep.mubr.f32.mxu0 0.0
      %415 = vmatmul.mubr.f32.gmra.mrb[0].mxu0 %v343
      %v416 = vpop.f32.mrb[0].mxu0
      %v417 = vadd.f32 %v336, %v416
      %v418 = vpop.f32.mrb[0].mxu0
      %419 = vdwg.mxu0
      %422 = vrot.lane.b32.xlu0 %v328, 4
      %v423 = vpop.permute.xlu0 %422
      %424 = vrot.lane.b32.xlu0 %v329, 4
      %v425 = vpop.permute.xlu0 %424
      %vm428 = vcmask 31744
      %v429 = vsel %vm428, %v412, %v423
      %v430 = vsel %vm428, %v417, %v425
      %433 = vrot.lane.b32.xlu0 %v412, 124
      %v434 = vpop.permute.xlu0 %433
      %435 = vrot.lane.b32.xlu0 %v417, 124
      %v436 = vpop.permute.xlu0 %435
      %v439 = vsel %vm428, %v434, %v328
      %v440 = vsel %vm428, %v436, %v329
      %v441 = vlaneseq
      %v442 = vshrl.u32 %v441, 7
      %v443 = vadd.s32 %v442, 8
      %vm444 = vcmp.eq.s32.totalorder %v442, 0
      %vm445 = vcmp.eq.s32.totalorder %v443, 0
      %v446 = vrot.slane %v439, 7
      %v447 = vrot.slane %v440, 7
      %vm448 = vcmp.lt.s32.totalorder %v442, 1
      %v449 = vsel %vm448, %v446, %v447
      %v450 = vsel %vm448, %v447, %v446
      %v451 = vsel %vm444, 0.0, %v450
      %v452 = vsel %vm445, 0.0, %v449
      %455 = vrot.lane.b32.xlu0 %v429, 8
      %v456 = vpop.permute.xlu0 %455
      %457 = vrot.lane.b32.xlu0 %v430, 8
      %v458 = vpop.permute.xlu0 %457
      %463 = vrot.lane.b32.xlu0 %v439, 16
      %v464 = vpop.permute.xlu0 %463
      %465 = vrot.lane.b32.xlu0 %v440, 16
      %v466 = vpop.permute.xlu0 %465
      %v469 = vsel %vm338, %v451, %v456
      %v470 = vsel %vm338, %v452, %v458
      %vm471 = vcmask 130048
      %v472 = vsel %vm471, %v469, %v464
      %v473 = vsel %vm471, %v470, %v466
      %vm474 = vcmp.eq.s32.totalorder %v442, 15
      %vm475 = vcmp.eq.s32.totalorder %v443, 15
      %v476 = vrot.slane %v429, 1
      %v477 = vrot.slane %v430, 1
      %vm478 = vcmp.lt.s32.totalorder %v442, 7
      %v479 = vsel %vm478, %v476, %v477
      %v480 = vsel %vm478, %v477, %v476
      %v481 = vsel %vm474, 0.0, %v479
      %v482 = vsel %vm475, 0.0, %v480
      %483 = vrot.lane.b32.xlu0 %v439, 8
      %v484 = vpop.permute.xlu0 %483
      %485 = vrot.lane.b32.xlu0 %v440, 8
      %v486 = vpop.permute.xlu0 %485
      %491 = vrot.lane.b32.xlu0 %v481, 16
      %v492 = vpop.permute.xlu0 %491
      %493 = vrot.lane.b32.xlu0 %v482, 16
      %v494 = vpop.permute.xlu0 %493
      %v497 = vsel %vm338, %v429, %v484
      %v498 = vsel %vm338, %v430, %v486
      %v499 = vsel %vm471, %v497, %v492
      %v500 = vsel %vm471, %v498, %v494
      %v501 = vld [vmem:[%s4] sm:$0xff]
      %v502 = vld [vmem:[%s4 + $0x8] sm:$0xff]
      %v503 = vld [vmem:[%s4 + $0x10] sm:$0xff]
      %v504 = vld [vmem:[%s5] sm:$0x1]
      %v506 = vlaneseq
      %v507 = vshrl.u32 %v506, 7
      %v508 = vsub.s32 0, %v507
      %v509 = vrot.slane %v504, %v508
      %vm511 = vcmask 195584
      %v513 = vsel %vm511, %v472, 0
      %v516 = vsel %vm511, %v473, 0
      %v519 = vsel %vm511, %v499, 0
      %v522 = vsel %vm511, %v500, 0
      %524 = vmatprep.subr.mxu0 0.0
      %525 = vmatpush1.msra.mxu0 %v501
      %526 = vmatprep.subr.mxu0 0.0
      %527 = vmatpush1.msra.mxu0 %v502
      %528 = vmatprep.subr.mxu0 0.0
      %529 = vmatpush1.msra.mxu0 %v503
      %530 = vmatprep.subr.mxu0 0.0
      %531 = vmatpush1.msra.mxu0 0.0
      %532 = vmatprep.subr.mxu0 0.0
      %533 = vmatpush1.msra.mxu0 0.0
      %534 = vmatprep.subr.mxu0 0.0
      %535 = vmatpush1.msra.mxu0 0.0
      %536 = vmatprep.subr.mxu0 0.0
      %537 = vmatpush1.msra.mxu0 0.0
      %538 = vmatprep.subr.mxu0 0.0
      %539 = vmatpush1.msra.mxu0 0.0
      %540 = vmatprep.subr.mxu0 0.0
      %541 = vmatpush1.msra.mxu0 0.0
      %542 = vmatprep.subr.mxu0 0.0
      %543 = vmatpush1.msra.mxu0 0.0
      %544 = vmatprep.subr.mxu0 0.0
      %545 = vmatpush1.msra.mxu0 0.0
      %546 = vmatprep.subr.mxu0 0.0
      %547 = vmatpush1.msra.mxu0 0.0
      %548 = vmatprep.subr.mxu0 0.0
      %549 = vmatpush1.msra.mxu0 0.0
      %550 = vmatprep.subr.mxu0 0.0
      %551 = vmatpush1.msra.mxu0 0.0
      %552 = vmatprep.subr.mxu0 0.0
      %553 = vmatpush1.msra.mxu0 0.0
      %554 = vmatprep.subr.mxu0 0.0
      %555 = vmatpush1.msra.mxu0 0.0
      %556 = vmatprep.subr.mxu0 0.0
      %557 = vmatpush1.msra.mxu0 0.0
      %558 = vmatprep.subr.mxu0 0.0
      %559 = vmatpush1.msra.mxu0 0.0
      %560 = vmatprep.subr.mxu0 0.0
      %561 = vmatpush1.msra.mxu0 0.0
      %562 = vmatprep.subr.mxu0 0.0
      %563 = vmatpush1.msra.mxu0 0.0
      %564 = vmatprep.subr.mxu0 0.0
      %565 = vmatpush1.msra.mxu0 0.0
      %566 = vmatprep.subr.mxu0 0.0
      %567 = vmatpush1.msra.mxu0 0.0
      %568 = vmatprep.subr.mxu0 0.0
      %569 = vmatpush1.msra.mxu0 0.0
      %570 = vmatprep.subr.mxu0 0.0
      %571 = vmatpush1.msra.mxu0 0.0
      %572 = vmatprep.subr.mxu0 0.0
      %573 = vmatpush1.msra.mxu0 0.0
      %574 = vmatprep.subr.mxu0 0.0
      %575 = vmatpush1.msra.mxu0 0.0
      %576 = vmatprep.subr.mxu0 0.0
      %577 = vmatpush1.msra.mxu0 0.0
      %578 = vmatprep.subr.mxu0 0.0
      %579 = vmatpush1.msra.mxu0 0.0
      %580 = vmatprep.subr.mxu0 0.0
      %581 = vmatpush1.msra.mxu0 0.0
      %582 = vmatprep.subr.mxu0 0.0
      %583 = vmatpush1.msra.mxu0 0.0
      %584 = vmatprep.subr.mxu0 0.0
      %585 = vmatpush1.msra.mxu0 0.0
      %586 = vmatprep.subr.mxu0 0.0
      %587 = vmatpush1.msra.mxu0 0.0
      %588 = vmatprep.mubr.f32.mxu0 0.0
      %589 = vmatmul.mubr.f32.gmra.mrb[0].mxu0 %v513
      %v590 = vpop.f32.mrb[0].mxu0
      %v591 = vadd.f32 %v509, %v590
      %v592 = vpop.f32.mrb[0].mxu0
      %593 = vmatprep.mubr.f32.mxu0 0.0
      %594 = vmatmul.mubr.f32.gmra.mrb[0].mxu0 %v516
      %v595 = vpop.f32.mrb[0].mxu0
      %v596 = vadd.f32 %v509, %v595
      %v597 = vpop.f32.mrb[0].mxu0
      %598 = vmatprep.mubr.f32.mxu0 0.0
      %599 = vmatmul.mubr.f32.gmra.mrb[0].mxu0 %v519
      %v600 = vpop.f32.mrb[0].mxu0
      %v601 = vadd.f32 %v509, %v600
      %v602 = vpop.f32.mrb[0].mxu0
      %603 = vmatprep.mubr.f32.mxu0 0.0
      %604 = vmatmul.mubr.f32.gmra.mrb[0].mxu0 %v522
      %v605 = vpop.f32.mrb[0].mxu0
      %v606 = vadd.f32 %v509, %v605
      %v607 = vpop.f32.mrb[0].mxu0
      %608 = vdwg.mxu0
      %v609 = vmax.f32 %v591, 0.0
      %v610 = vmax.f32 %v596, 0.0
      %v611 = vmax.f32 %v601, 0.0
      %v612 = vmax.f32 %v606, 0.0
      %v613 = vrot.slane %v611, 7
      %v614 = vrot.slane %v612, 7
      %v615 = vsel %vm448, %v613, %v614
      %v616 = vsel %vm448, %v614, %v613
      %v617 = vsel %vm444, 0.0, %v616
      %v618 = vsel %vm445, 0.0, %v615
      %621 = vrot.lane.b32.xlu0 %v609, 4
      %v622 = vpop.permute.xlu0 %621
      %623 = vrot.lane.b32.xlu0 %v610, 4
      %v624 = vpop.permute.xlu0 %623
      %629 = vrot.lane.b32.xlu0 %v611, 8
      %v630 = vpop.permute.xlu0 %629
      %631 = vrot.lane.b32.xlu0 %v612, 8
      %v632 = vpop.permute.xlu0 %631
      %v635 = vsel %vm428, %v617, %v622
      %v636 = vsel %vm428, %v618, %v624
      %v637 = vsel %vm338, %v635, %v630
      %v638 = vsel %vm338, %v636, %v632
      %v639 = vrot.slane %v609, 1
      %v640 = vrot.slane %v610, 1
      %v641 = vsel %vm478, %v639, %v640
      %v642 = vsel %vm478, %v640, %v639
      %v643 = vsel %vm474, 0.0, %v641
      %v644 = vsel %vm475, 0.0, %v642
      %645 = vrot.lane.b32.xlu0 %v611, 4
      %v646 = vpop.permute.xlu0 %645
      %647 = vrot.lane.b32.xlu0 %v612, 4
      %v648 = vpop.permute.xlu0 %647
      %653 = vrot.lane.b32.xlu0 %v643, 8
      %v654 = vpop.permute.xlu0 %653
      %655 = vrot.lane.b32.xlu0 %v644, 8
      %v656 = vpop.permute.xlu0 %655
      %v659 = vsel %vm428, %v609, %v646
      %v660 = vsel %vm428, %v610, %v648
      %v661 = vsel %vm338, %v659, %v654
      %v662 = vsel %vm338, %v660, %v656
      %v663 = vld [vmem:[%s6] sm:$0xff]
      %v664 = vld [vmem:[%s6 + $0x8] sm:$0xf]
      %v665 = vld [vmem:[%s7] sm:$0x1]
      %v667 = vlaneseq
      %v668 = vshrl.u32 %v667, 7
      %v669 = vsub.s32 0, %v668
      %v670 = vrot.slane %v665, %v669
      %vm672 = vcmask 97280
      %v674 = vsel %vm672, %v637, 0
      %v677 = vsel %vm672, %v638, 0
      %v680 = vsel %vm672, %v661, 0
      %v683 = vsel %vm672, %v662, 0
      %vm685 = vcmask 1043456
      %v687 = vsel %vm685, %v664, 0
      %689 = vmatprep.subr.mxu0 0.0
      %690 = vmatpush1.msra.mxu0 %v663
      %691 = vmatprep.subr.mxu0 0.0
      %692 = vmatpush1.msra.mxu0 %v687
      %693 = vmatprep.subr.mxu0 0.0
      %694 = vmatpush1.msra.mxu0 0.0
      %695 = vmatprep.subr.mxu0 0.0
      %696 = vmatpush1.msra.mxu0 0.0
      %697 = vmatprep.subr.mxu0 0.0
      %698 = vmatpush1.msra.mxu0 0.0
      %699 = vmatprep.subr.mxu0 0.0
      %700 = vmatpush1.msra.mxu0 0.0
      %701 = vmatprep.subr.mxu0 0.0
      %702 = vmatpush1.msra.mxu0 0.0
      %703 = vmatprep.subr.mxu0 0.0
      %704 = vmatpush1.msra.mxu0 0.0
      %705 = vmatprep.subr.mxu0 0.0
      %706 = vmatpush1.msra.mxu0 0.0
      %707 = vmatprep.subr.mxu0 0.0
      %708 = vmatpush1.msra.mxu0 0.0
      %709 = vmatprep.subr.mxu0 0.0
      %710 = vmatpush1.msra.mxu0 0.0
      %711 = vmatprep.subr.mxu0 0.0
      %712 = vmatpush1.msra.mxu0 0.0
      %713 = vmatprep.subr.mxu0 0.0
      %714 = vmatpush1.msra.mxu0 0.0
      %715 = vmatprep.subr.mxu0 0.0
      %716 = vmatpush1.msra.mxu0 0.0
      %717 = vmatprep.subr.mxu0 0.0
      %718 = vmatpush1.msra.mxu0 0.0
      %719 = vmatprep.subr.mxu0 0.0
      %720 = vmatpush1.msra.mxu0 0.0
      %721 = vmatprep.subr.mxu0 0.0
      %722 = vmatpush1.msra.mxu0 0.0
      %723 = vmatprep.subr.mxu0 0.0
      %724 = vmatpush1.msra.mxu0 0.0
      %725 = vmatprep.subr.mxu0 0.0
      %726 = vmatpush1.msra.mxu0 0.0
      %727 = vmatprep.subr.mxu0 0.0
      %728 = vmatpush1.msra.mxu0 0.0
      %729 = vmatprep.subr.mxu0 0.0
      %730 = vmatpush1.msra.mxu0 0.0
      %731 = vmatprep.subr.mxu0 0.0
      %732 = vmatpush1.msra.mxu0 0.0
      %733 = vmatprep.subr.mxu0 0.0
      %734 = vmatpush1.msra.mxu0 0.0
      %735 = vmatprep.subr.mxu0 0.0
      %736 = vmatpush1.msra.mxu0 0.0
      %737 = vmatprep.subr.mxu0 0.0
      %738 = vmatpush1.msra.mxu0 0.0
      %739 = vmatprep.subr.mxu0 0.0
      %740 = vmatpush1.msra.mxu0 0.0
      %741 = vmatprep.subr.mxu0 0.0
      %742 = vmatpush1.msra.mxu0 0.0
      %743 = vmatprep.subr.mxu0 0.0
      %744 = vmatpush1.msra.mxu0 0.0
      %745 = vmatprep.subr.mxu0 0.0
      %746 = vmatpush1.msra.mxu0 0.0
      %747 = vmatprep.subr.mxu0 0.0
      %748 = vmatpush1.msra.mxu0 0.0
      %749 = vmatprep.subr.mxu0 0.0
      %750 = vmatpush1.msra.mxu0 0.0
      %751 = vmatprep.subr.mxu0 0.0
      %752 = vmatpush1.msra.mxu0 0.0
      %753 = vmatprep.mubr.f32.mxu0 0.0
      %754 = vmatmul.mubr.f32.gmra.mrb[0].mxu0 %v674
      %v755 = vpop.f32.mrb[0].mxu0
      %v756 = vadd.f32 %v670, %v755
      %v757 = vpop.f32.mrb[0].mxu0
      %758 = vmatprep.mubr.f32.mxu0 0.0
      %759 = vmatmul.mubr.f32.gmra.mrb[0].mxu0 %v677
      %v760 = vpop.f32.mrb[0].mxu0
      %v761 = vadd.f32 %v670, %v760
      %v762 = vpop.f32.mrb[0].mxu0
      %763 = vmatprep.mubr.f32.mxu0 0.0
      %764 = vmatmul.mubr.f32.gmra.mrb[0].mxu0 %v680
      %v765 = vpop.f32.mrb[0].mxu0
      %v766 = vadd.f32 %v670, %v765
      %v767 = vpop.f32.mrb[0].mxu0
      %768 = vmatprep.mubr.f32.mxu0 0.0
      %769 = vmatmul.mubr.f32.gmra.mrb[0].mxu0 %v683
      %v770 = vpop.f32.mrb[0].mxu0
      %v771 = vadd.f32 %v670, %v770
      %v772 = vpop.f32.mrb[0].mxu0
      %773 = vdwg.mxu0
      %v774 = vmax.f32 %v756, 0.0
      %v775 = vmax.f32 %v761, 0.0
      %v776 = vmax.f32 %v766, 0.0
      %v777 = vmax.f32 %v771, 0.0
      %780 = vrot.lane.b32.xlu0 %v776, 4
      %v781 = vpop.permute.xlu0 %780
      %782 = vrot.lane.b32.xlu0 %v777, 4
      %v783 = vpop.permute.xlu0 %782
      %v786 = vsel %vm428, %v774, %v781
      %v787 = vsel %vm428, %v775, %v783
      %788 = vst.msk [vmem:[%s325] sm:$0xff] %vm338, %v786
      %789 = vst.msk [vmem:[%s325 + $0x8] sm:$0xff] %vm338, %v787
      %p790 = scmp.lt.s32.totalorder %s19, 1
      %s791 = scalar_select %p790, %s19, 1
      %s792 = smul.addr %s791, 2
      %s793 = smul.addr %s792, 8
      %s794 = scalar_lea.vmem %s8, %s793
      // Predicated region
      $region53: #{decoder_forward.3} parent=51 // pred_check
        %p795 = pneg %p215
      $region54: #{decoder_forward.3} parent=51 // pred_check_branch
        %797 = sbr.rel (%p795) target = $region56
      $region55: #{decoder_forward.3} parent=51 // pred_region
        _
      $region56: #{decoder_forward.3} parent=51 // pred_fallthru
        _
    $region52: #{decoder_forward.3} parent=5 // pred_fallthru
      _
    %p798 = scmp.le.s32.totalorder 2, %s14
    // Predicated region
    $region57: #{decoder_forward.3} parent=5 // pred_check
      %p799 = pneg %p798
    $region58: #{decoder_forward.3} parent=5 // pred_check_branch
      %801 = sbr.rel (%p799) target = $region60
    $region59: #{decoder_forward.3} parent=5 // pred_region
      %s802 = ssub.s32 %s14, 2
      // Predicated region
      $region61: #{decoder_forward.3} parent=59 // pred_check
        %p803 = pneg %p221
      $region62: #{decoder_forward.3} parent=59 // pred_check_branch
        %805 = sbr.rel (%p803) target = $region64
      $region63: #{decoder_forward.3} parent=59 // pred_region
        %p806 = scmp.lt.s32.totalorder %s20, 1
        %s807 = scalar_select %p806, %s20, 1
        %s808 = smul.addr %s807, 2
        %s809 = smul.addr %s808, 8
        %s810 = scalar_lea.vmem %s8, %s809
      $region64: #{decoder_forward.3} parent=59 // pred_fallthru
        _
    $region60: #{decoder_forward.3} parent=5 // pred_fallthru
      _
  $region6: #{decoder_forward.3} parent=0 // loop_footer
    %s18 = sadd.s32 1, %s14
  $region7: #{decoder_forward.3} parent=0 // loop_footer_branch
    %13 = sbr.rel target = $region3
  $region8: #{decoder_forward.3} parent=0 // loop_exit
    _

</llo_original>
